<compile_context>
chip_gen: v7x
topology: tpu7x:2x2x1
jax: 0.10.0
libtpu: 0.0.40
codegen_flags: <defaults>
</compile_context>

<pallas_src>
import functools

import jax
import jax.numpy as jnp
from jax.experimental import pallas as pl
from jax.experimental.pallas import tpu as pltpu


def _round_up(v, m):
    return ((v + m - 1) // m) * m


def _shader_kernel(l_ref, x_ref, s_ref, n_ref, v_ref,
                   w1l_ref, w1x_ref, w1s_ref, w1n_ref, w1v_ref, b1_ref,
                   w2_ref, b2_ref, wh_ref, bh_ref,
                   out_ref):
    """Fused per-pixel MLP, channel-major (pixel axis = lanes).

    Activations arrive as (1, C, TM) bf16 tiles; weights are resident bf16.
    All matmuls accumulate in f32 on the MXU; bias/relu stay f32 (v5e-safe),
    then the hidden state is narrowed back to bf16 for the next matmul.
    """
    def dot(w_ref, a_ref):
        return jnp.dot(w_ref[...],            # (H, C)  bf16
                       a_ref[0],              # (C, TM) bf16 (no in-kernel cast)
                       preferred_element_type=jnp.float32)

    # Layer 1: split-K over the five input tensors (no materialized concat).
    h = (dot(w1l_ref, l_ref) + dot(w1x_ref, x_ref) + dot(w1s_ref, s_ref)
         + dot(w1n_ref, n_ref) + dot(w1v_ref, v_ref))
    h = jnp.maximum(h + b1_ref[...], 0.0).astype(jnp.bfloat16)     # (H, TM)

    # Layer 2.
    h = jnp.dot(w2_ref[...], h, preferred_element_type=jnp.float32)
    h = jnp.maximum(h + b2_ref[...], 0.0).astype(jnp.bfloat16)     # (H, TM)

    # Packed heads: rows 0-2 diffuse, 3-5 specular, 6-7 dead (zero weights).
    heads = jnp.dot(wh_ref[...], h, preferred_element_type=jnp.float32)
    heads = heads + bh_ref[...]                                     # (8, TM) f32
    sig = pl.reciprocal(1.0 + jnp.exp(-heads), approx=True)         # EUP rcp
    out_ref[0] = sig.astype(out_ref.dtype)                          # lane-dense bf16 store


def _cnet_pallas(l, x, s, n, v, params, *, tile_hw):
    """l/x/s: (B, C_i, HW) bf16; n/v: (B, 3, HW) bf16.  Returns (B, 8, HW) bf16."""
    B, _, HW = l.shape
    n_t = pl.cdiv(HW, tile_hw)                 # ragged last tile handled by Pallas

    def act_spec(c):
        return pl.BlockSpec((1, c, tile_hw), lambda b, t: (b, 0, t))

    def full_spec(arr):
        nd = arr.ndim
        return pl.BlockSpec(arr.shape, lambda b, t, _nd=nd: (0,) * _nd)

    return pl.pallas_call(
        _shader_kernel,
        out_shape=jax.ShapeDtypeStruct((B, 8, HW), jnp.bfloat16),
        grid_spec=pltpu.PrefetchScalarGridSpec(
            num_scalar_prefetch=0,
            grid=(B, n_t),
            in_specs=[
                act_spec(l.shape[1]),            # l_embedding   (B,16,HW)
                act_spec(x.shape[1]),            # x_embedding   (B,32,HW)
                act_spec(s.shape[1]),            # s_feat        (B,16,HW)
                act_spec(3),                     # normal        (B, 3,HW)
                act_spec(3),                     # view_dir      (B, 3,HW)
                full_spec(params["w1_l"]), full_spec(params["w1_x"]),
                full_spec(params["w1_s"]), full_spec(params["w1_n"]),
                full_spec(params["w1_v"]), full_spec(params["b1"]),
                full_spec(params["w2"]), full_spec(params["b2"]),
                full_spec(params["wh"]), full_spec(params["bh"]),
            ],
            out_specs=pl.BlockSpec((1, 8, tile_hw), lambda b, t: (b, 0, t)),
        ),
        compiler_params=pltpu.CompilerParams(
            dimension_semantics=("parallel", "parallel"),
            vmem_limit_bytes=32 * 1024 * 1024),
    )(l, x, s, n, v,
      params["w1_l"], params["w1_x"], params["w1_s"], params["w1_n"],
      params["w1_v"], params["b1"], params["w2"], params["b2"],
      params["wh"], params["bh"])


def init_cnet_params(key, l_dim, x_dim, s_dim, hidden=128):
    """Deterministic synthetic weights, pre-packed into the kernel layout.

    Weights are stored channel-major / conv1x1 style (out, in), split per input
    tensor (l / x / s / normal / view_dir), heads fused into one (8, hidden)
    matrix, and cast to bf16 (biases stay f32).  Done once at init, never per
    call.
    """
    ks = jax.random.split(key, 4)
    c_in = l_dim + x_dim + s_dim + 3 + 3
    sc_in = 1.0 / jnp.sqrt(c_in)
    sc_h = 1.0 / jnp.sqrt(hidden)

    w1 = jax.random.normal(ks[0], (hidden, c_in), jnp.float32) * sc_in
    w2 = jax.random.normal(ks[1], (hidden, hidden), jnp.float32) * sc_h
    wd = jax.random.normal(ks[2], (3, hidden), jnp.float32) * sc_h
    ws_ = jax.random.normal(ks[3], (3, hidden), jnp.float32) * sc_h

    # Split w1 into per-input column blocks.
    o = 0
    w1_l = w1[:, o:o + l_dim]; o += l_dim
    w1_x = w1[:, o:o + x_dim]; o += x_dim
    w1_s = w1[:, o:o + s_dim]; o += s_dim
    w1_n = w1[:, o:o + 3]; o += 3
    w1_v = w1[:, o:o + 3]; o += 3

    # Fused heads: rows 0-2 diffuse, 3-5 specular, 6-7 dead.
    wh = jnp.concatenate([wd, ws_, jnp.zeros((2, hidden), jnp.float32)], axis=0)

    bf = jnp.bfloat16
    return {
        "w1_l": w1_l.astype(bf), "w1_x": w1_x.astype(bf),
        "w1_s": w1_s.astype(bf), "w1_n": w1_n.astype(bf),
        "w1_v": w1_v.astype(bf),
        "b1": jnp.zeros((hidden, 1), jnp.float32),
        "w2": w2.astype(bf),
        "b2": jnp.zeros((hidden, 1), jnp.float32),
        "wh": wh.astype(bf),
        "bh": jnp.zeros((8, 1), jnp.float32),
    }


def implicit_shader_forward(params, c_embedding, l_embedding, x_embedding,
                            d_embedding, xyz, view_dir, normal):
    """Mirrors ImplicitShader.forward: returns (z, n) plus (diffuse, specular)."""
    del d_embedding, xyz  # not consumed by render_net_c in the reference forward
    B, _, Hs, Ws = normal.shape
    HW = Hs * Ws
    bf = jnp.bfloat16

    def prep(a):
        # Pure reshape; cast only if the producer did not already emit bf16.
        a = a.reshape(B, -1, HW)
        return a if a.dtype == bf else a.astype(bf)

    l = prep(l_embedding)
    x = prep(x_embedding)
    s = prep(c_embedding)
    n = prep(normal)
    v = prep(view_dir)

    # Big lane-dense pixel tiles; no HBM padding pass (ragged tail handled in-grid).
    tile_hw = min(4096, _round_up(HW, 128))
    out = _cnet_pallas(l, x, s, n, v, params, tile_hw=tile_hw)     # (B, 8, HW) bf16
    out = out[:, :, :HW].reshape(B, 8, Hs, Ws).astype(jnp.float32)

    dl = out[:, 0:3]
    sl = out[:, 3:6]
    z = dl + sl
    return (z, normal), (dl, sl)


def _reference_forward(params, l, x, s, n, v):
    """Pure-JAX reference with matched bf16-operand / f32-accumulate numerics."""
    def f32(a):
        return a.astype(jnp.float32)

    def mm(wname, a):
        return jnp.einsum("oc,bcm->bom", f32(params[wname]), f32(a))

    h = (mm("w1_l", l) + mm("w1_x", x) + mm("w1_s", s)
         + mm("w1_n", n) + mm("w1_v", v) + params["b1"][None])
    h = jnp.maximum(h, 0.0).astype(jnp.bfloat16)
    h = jnp.einsum("oc,bcm->bom", f32(params["w2"]), f32(h)) + params["b2"][None]
    h = jnp.maximum(h, 0.0).astype(jnp.bfloat16)
    heads = (jnp.einsum("oc,bcm->bom", f32(params["wh"]), f32(h))
             + params["bh"][None])
    return jax.nn.sigmoid(heads)                                   # (B, 8, HW) f32


if __name__ == "__main__":
    key = jax.random.PRNGKey(0)

    B, Hs, Ws = 2, 16, 16              # batch, spatial
    L_DIM, X_DIM, S_DIM = 16, 32, 16   # embedding channel widths
    HIDDEN = 128                       # lane/MXU-aligned hidden width

    k_in, k_par = jax.random.split(key)
    ks = jax.random.split(k_in, 7)
    # Embeddings / geometry are produced in bf16 upstream (no standalone cast pass).
    c_embedding = jax.random.normal(ks[0], (B, S_DIM, Hs, Ws), jnp.bfloat16)
    l_embedding = jax.random.normal(ks[1], (B, L_DIM, Hs, Ws), jnp.bfloat16)
    x_embedding = jax.random.normal(ks[2], (B, X_DIM, Hs, Ws), jnp.bfloat16)
    d_embedding = jax.random.normal(ks[3], (B, X_DIM, Hs, Ws), jnp.bfloat16)  # unused
    xyz = jax.random.normal(ks[4], (B, 3, Hs, Ws), jnp.bfloat16)              # unused
    view_dir = jax.random.normal(ks[5], (B, 3, Hs, Ws), jnp.bfloat16)
    normal = jax.random.normal(ks[6], (B, 3, Hs, Ws), jnp.bfloat16)

    params = init_cnet_params(k_par, L_DIM, X_DIM, S_DIM, HIDDEN)

    fwd = jax.jit(functools.partial(implicit_shader_forward, params))
    (z, n_out), (diffuse, specular) = fwd(
        c_embedding, l_embedding, x_embedding, d_embedding,
        xyz, view_dir, normal)
    jax.block_until_ready((z, n_out, diffuse, specular))

    # Validate against a pure-JAX reference with matched matmul precision.
    # Tolerance covers bf16 output quantization (~2e-3) + approx EUP reciprocal.
    HW = Hs * Ws
    l_r = l_embedding.reshape(B, L_DIM, HW)
    x_r = x_embedding.reshape(B, X_DIM, HW)
    s_r = c_embedding.reshape(B, S_DIM, HW)
    n_r = normal.reshape(B, 3, HW)
    v_r = view_dir.reshape(B, 3, HW)
    ref = _reference_forward(params, l_r, x_r, s_r, n_r, v_r).reshape(B, 8, Hs, Ws)
    dl_ref, sl_ref = ref[:, 0:3], ref[:, 3:6]

    assert z.shape == (B, 3, Hs, Ws)
    assert n_out.shape == (B, 3, Hs, Ws)
    assert jnp.allclose(diffuse, dl_ref, atol=5e-3, rtol=5e-3)
    assert jnp.allclose(specular, sl_ref, atol=5e-3, rtol=5e-3)
    assert jnp.allclose(z, diffuse + specular)
    assert jnp.allclose(n_out, normal)

    print("KERNEL_OK")
</pallas_src>

<mosaic_0001>
module attributes {stable_mosaic.version = 11 : i64} {
  func.func @_shader_kernel(%arg0: i32, %arg1: i32, %arg2: memref<1x16x256xbf16, #tpu.memory_space<vmem>>, %arg3: memref<1x32x256xbf16, #tpu.memory_space<vmem>>, %arg4: memref<1x16x256xbf16, #tpu.memory_space<vmem>>, %arg5: memref<1x3x256xbf16, #tpu.memory_space<vmem>>, %arg6: memref<1x3x256xbf16, #tpu.memory_space<vmem>>, %arg7: memref<128x16xbf16, #tpu.memory_space<vmem>>, %arg8: memref<128x32xbf16, #tpu.memory_space<vmem>>, %arg9: memref<128x16xbf16, #tpu.memory_space<vmem>>, %arg10: memref<128x3xbf16, #tpu.memory_space<vmem>>, %arg11: memref<128x3xbf16, #tpu.memory_space<vmem>>, %arg12: memref<128x1xf32, #tpu.memory_space<vmem>>, %arg13: memref<128x128xbf16, #tpu.memory_space<vmem>>, %arg14: memref<128x1xf32, #tpu.memory_space<vmem>>, %arg15: memref<8x128xbf16, #tpu.memory_space<vmem>>, %arg16: memref<8x1xf32, #tpu.memory_space<vmem>>, %arg17: memref<1x8x256xbf16, #tpu.memory_space<vmem>>) attributes {dimension_semantics = [#tpu.dimension_semantics<parallel>, #tpu.dimension_semantics<parallel>], iteration_bounds = array<i64: 2, 1>, scalar_prefetch = 0 : i64, scratch_operands = 0 : i64, tpu.core_type = #tpu.core_type<tc>, window_params = [{transform_indices = @transform_0, window_bounds = array<i64: 1, 16, 256>}, {transform_indices = @transform_1, window_bounds = array<i64: 1, 32, 256>}, {transform_indices = @transform_2, window_bounds = array<i64: 1, 16, 256>}, {transform_indices = @transform_3, window_bounds = array<i64: 1, 3, 256>}, {transform_indices = @transform_4, window_bounds = array<i64: 1, 3, 256>}, {pipeline_mode = #tpu.pipeline_mode<synchronous>, transform_indices = @transform_5, window_bounds = array<i64: 128, 16>}, {pipeline_mode = #tpu.pipeline_mode<synchronous>, transform_indices = @transform_6, window_bounds = array<i64: 128, 32>}, {pipeline_mode = #tpu.pipeline_mode<synchronous>, transform_indices = @transform_7, window_bounds = array<i64: 128, 16>}, {pipeline_mode = #tpu.pipeline_mode<synchronous>, transform_indices = @transform_8, window_bounds = array<i64: 128, 3>}, {pipeline_mode = #tpu.pipeline_mode<synchronous>, transform_indices = @transform_9, window_bounds = array<i64: 128, 3>}, {pipeline_mode = #tpu.pipeline_mode<synchronous>, transform_indices = @transform_10, window_bounds = array<i64: 128, 1>}, {pipeline_mode = #tpu.pipeline_mode<synchronous>, transform_indices = @transform_11, window_bounds = array<i64: 128, 128>}, {pipeline_mode = #tpu.pipeline_mode<synchronous>, transform_indices = @transform_12, window_bounds = array<i64: 128, 1>}, {pipeline_mode = #tpu.pipeline_mode<synchronous>, transform_indices = @transform_13, window_bounds = array<i64: 8, 128>}, {pipeline_mode = #tpu.pipeline_mode<synchronous>, transform_indices = @transform_14, window_bounds = array<i64: 8, 1>}, {transform_indices = @transform_15, window_bounds = array<i64: 1, 8, 256>}]} {
    %c0 = arith.constant 0 : index
    %c0_0 = arith.constant 0 : index
    %0 = vector.load %arg7[%c0, %c0_0] : memref<128x16xbf16, #tpu.memory_space<vmem>>, vector<128x16xbf16>
    %c0_1 = arith.constant 0 : index
    %c0_2 = arith.constant 0 : index
    %c0_3 = arith.constant 0 : index
    %1 = vector.load %arg2[%c0_1, %c0_2, %c0_3] : memref<1x16x256xbf16, #tpu.memory_space<vmem>>, vector<1x16x256xbf16>
    %2 = vector.shape_cast %1 : vector<1x16x256xbf16> to vector<16x256xbf16>
    %cst = arith.constant dense<0.000000e+00> : vector<128x256xf32>
    %3 = tpu.matmul %0, %2, %cst {dimension_numbers = #tpu.dot_dimension_numbers<[1], [0], [0], [1], [0, 0, 1, 1], [], []>} : vector<128x16xbf16>, vector<16x256xbf16>, vector<128x256xf32> -> vector<128x256xf32>
    %c0_4 = arith.constant 0 : index
    %c0_5 = arith.constant 0 : index
    %4 = vector.load %arg8[%c0_4, %c0_5] : memref<128x32xbf16, #tpu.memory_space<vmem>>, vector<128x32xbf16>
    %c0_6 = arith.constant 0 : index
    %c0_7 = arith.constant 0 : index
    %c0_8 = arith.constant 0 : index
    %5 = vector.load %arg3[%c0_6, %c0_7, %c0_8] : memref<1x32x256xbf16, #tpu.memory_space<vmem>>, vector<1x32x256xbf16>
    %6 = vector.shape_cast %5 : vector<1x32x256xbf16> to vector<32x256xbf16>
    %cst_9 = arith.constant dense<0.000000e+00> : vector<128x256xf32>
    %7 = tpu.matmul %4, %6, %cst_9 {dimension_numbers = #tpu.dot_dimension_numbers<[1], [0], [0], [1], [0, 0, 1, 1], [], []>} : vector<128x32xbf16>, vector<32x256xbf16>, vector<128x256xf32> -> vector<128x256xf32>
    %8 = arith.addf %3, %7 : vector<128x256xf32>
    %c0_10 = arith.constant 0 : index
    %c0_11 = arith.constant 0 : index
    %9 = vector.load %arg9[%c0_10, %c0_11] : memref<128x16xbf16, #tpu.memory_space<vmem>>, vector<128x16xbf16>
    %c0_12 = arith.constant 0 : index
    %c0_13 = arith.constant 0 : index
    %c0_14 = arith.constant 0 : index
    %10 = vector.load %arg4[%c0_12, %c0_13, %c0_14] : memref<1x16x256xbf16, #tpu.memory_space<vmem>>, vector<1x16x256xbf16>
    %11 = vector.shape_cast %10 : vector<1x16x256xbf16> to vector<16x256xbf16>
    %cst_15 = arith.constant dense<0.000000e+00> : vector<128x256xf32>
    %12 = tpu.matmul %9, %11, %cst_15 {dimension_numbers = #tpu.dot_dimension_numbers<[1], [0], [0], [1], [0, 0, 1, 1], [], []>} : vector<128x16xbf16>, vector<16x256xbf16>, vector<128x256xf32> -> vector<128x256xf32>
    %13 = arith.addf %8, %12 : vector<128x256xf32>
    %c0_16 = arith.constant 0 : index
    %c0_17 = arith.constant 0 : index
    %14 = vector.load %arg10[%c0_16, %c0_17] : memref<128x3xbf16, #tpu.memory_space<vmem>>, vector<128x3xbf16>
    %c0_18 = arith.constant 0 : index
    %c0_19 = arith.constant 0 : index
    %c0_20 = arith.constant 0 : index
    %15 = vector.load %arg5[%c0_18, %c0_19, %c0_20] : memref<1x3x256xbf16, #tpu.memory_space<vmem>>, vector<1x3x256xbf16>
    %16 = vector.shape_cast %15 : vector<1x3x256xbf16> to vector<3x256xbf16>
    %cst_21 = arith.constant dense<0.000000e+00> : vector<128x256xf32>
    %17 = tpu.matmul %14, %16, %cst_21 {dimension_numbers = #tpu.dot_dimension_numbers<[1], [0], [0], [1], [0, 0, 1, 1], [], []>} : vector<128x3xbf16>, vector<3x256xbf16>, vector<128x256xf32> -> vector<128x256xf32>
    %18 = arith.addf %13, %17 : vector<128x256xf32>
    %c0_22 = arith.constant 0 : index
    %c0_23 = arith.constant 0 : index
    %19 = vector.load %arg11[%c0_22, %c0_23] : memref<128x3xbf16, #tpu.memory_space<vmem>>, vector<128x3xbf16>
    %c0_24 = arith.constant 0 : index
    %c0_25 = arith.constant 0 : index
    %c0_26 = arith.constant 0 : index
    %20 = vector.load %arg6[%c0_24, %c0_25, %c0_26] : memref<1x3x256xbf16, #tpu.memory_space<vmem>>, vector<1x3x256xbf16>
    %21 = vector.shape_cast %20 : vector<1x3x256xbf16> to vector<3x256xbf16>
    %cst_27 = arith.constant dense<0.000000e+00> : vector<128x256xf32>
    %22 = tpu.matmul %19, %21, %cst_27 {dimension_numbers = #tpu.dot_dimension_numbers<[1], [0], [0], [1], [0, 0, 1, 1], [], []>} : vector<128x3xbf16>, vector<3x256xbf16>, vector<128x256xf32> -> vector<128x256xf32>
    %23 = arith.addf %18, %22 : vector<128x256xf32>
    %c0_28 = arith.constant 0 : index
    %c0_29 = arith.constant 0 : index
    %24 = vector.load %arg12[%c0_28, %c0_29] : memref<128x1xf32, #tpu.memory_space<vmem>>, vector<128x1xf32>
    %25 = vector.broadcast %24 : vector<128x1xf32> to vector<128x256xf32>
    %26 = arith.addf %23, %25 : vector<128x256xf32>
    %cst_30 = arith.constant 0.000000e+00 : f32
    %27 = vector.broadcast %cst_30 : f32 to vector<128x256xf32>
    %28 = arith.maximumf %26, %27 : vector<128x256xf32>
    %29 = arith.truncf %28 : vector<128x256xf32> to vector<128x256xbf16>
    %c0_31 = arith.constant 0 : index
    %c0_32 = arith.constant 0 : index
    %30 = vector.load %arg13[%c0_31, %c0_32] : memref<128x128xbf16, #tpu.memory_space<vmem>>, vector<128x128xbf16>
    %cst_33 = arith.constant dense<0.000000e+00> : vector<128x256xf32>
    %31 = tpu.matmul %30, %29, %cst_33 {dimension_numbers = #tpu.dot_dimension_numbers<[1], [0], [0], [1], [0, 0, 1, 1], [], []>} : vector<128x128xbf16>, vector<128x256xbf16>, vector<128x256xf32> -> vector<128x256xf32>
    %c0_34 = arith.constant 0 : index
    %c0_35 = arith.constant 0 : index
    %32 = vector.load %arg14[%c0_34, %c0_35] : memref<128x1xf32, #tpu.memory_space<vmem>>, vector<128x1xf32>
    %33 = vector.broadcast %32 : vector<128x1xf32> to vector<128x256xf32>
    %34 = arith.addf %31, %33 : vector<128x256xf32>
    %cst_36 = arith.constant 0.000000e+00 : f32
    %35 = vector.broadcast %cst_36 : f32 to vector<128x256xf32>
    %36 = arith.maximumf %34, %35 : vector<128x256xf32>
    %37 = arith.truncf %36 : vector<128x256xf32> to vector<128x256xbf16>
    %c0_37 = arith.constant 0 : index
    %c0_38 = arith.constant 0 : index
    %38 = vector.load %arg15[%c0_37, %c0_38] : memref<8x128xbf16, #tpu.memory_space<vmem>>, vector<8x128xbf16>
    %cst_39 = arith.constant dense<0.000000e+00> : vector<8x256xf32>
    %39 = tpu.matmul %38, %37, %cst_39 {dimension_numbers = #tpu.dot_dimension_numbers<[1], [0], [0], [1], [0, 0, 1, 1], [], []>} : vector<8x128xbf16>, vector<128x256xbf16>, vector<8x256xf32> -> vector<8x256xf32>
    %c0_40 = arith.constant 0 : index
    %c0_41 = arith.constant 0 : index
    %40 = vector.load %arg16[%c0_40, %c0_41] : memref<8x1xf32, #tpu.memory_space<vmem>>, vector<8x1xf32>
    %41 = vector.broadcast %40 : vector<8x1xf32> to vector<8x256xf32>
    %42 = arith.addf %39, %41 : vector<8x256xf32>
    %cst_42 = arith.constant 0.000000e+00 : f32
    %43 = vector.broadcast %cst_42 : f32 to vector<8x256xf32>
    %44 = arith.subf %43, %42 : vector<8x256xf32>
    %45 = math.exp %44 : vector<8x256xf32>
    %cst_43 = arith.constant 1.000000e+00 : f32
    %46 = vector.broadcast %cst_43 : f32 to vector<8x256xf32>
    %47 = arith.addf %46, %45 : vector<8x256xf32>
    %48 = tpu.reciprocal %47 {approx = true} : vector<8x256xf32> -> vector<8x256xf32>
    %49 = arith.truncf %48 : vector<8x256xf32> to vector<8x256xbf16>
    %c0_44 = arith.constant 0 : index
    %c0_45 = arith.constant 0 : index
    %c0_46 = arith.constant 0 : index
    %50 = vector.load %arg17[%c0_44, %c0_45, %c0_46] : memref<1x8x256xbf16, #tpu.memory_space<vmem>>, vector<1x8x256xbf16>
    %51 = vector.shape_cast %50 : vector<1x8x256xbf16> to vector<8x256xbf16>
    %52 = vector.shape_cast %49 : vector<8x256xbf16> to vector<1x8x256xbf16>
    tpu.vector_store %arg17[%c0_44, %c0_45, %c0_46], %52 {strides = array<i32>} : memref<1x8x256xbf16, #tpu.memory_space<vmem>>, vector<1x8x256xbf16>,
    return
  }
  func.func @transform_0(%arg0: i32, %arg1: i32) -> (i32, i32, i32) {
    %c0_i32 = arith.constant 0 : i32
    %c0_i32_0 = arith.constant 0 : i32
    return %arg0, %c0_i32, %arg1 : i32, i32, i32
  }
  func.func @transform_1(%arg0: i32, %arg1: i32) -> (i32, i32, i32) {
    %c0_i32 = arith.constant 0 : i32
    %c0_i32_0 = arith.constant 0 : i32
    return %arg0, %c0_i32, %arg1 : i32, i32, i32
  }
  func.func @transform_2(%arg0: i32, %arg1: i32) -> (i32, i32, i32) {
    %c0_i32 = arith.constant 0 : i32
    %c0_i32_0 = arith.constant 0 : i32
    return %arg0, %c0_i32, %arg1 : i32, i32, i32
  }
  func.func @transform_3(%arg0: i32, %arg1: i32) -> (i32, i32, i32) {
    %c0_i32 = arith.constant 0 : i32
    %c0_i32_0 = arith.constant 0 : i32
    return %arg0, %c0_i32, %arg1 : i32, i32, i32
  }
  func.func @transform_4(%arg0: i32, %arg1: i32) -> (i32, i32, i32) {
    %c0_i32 = arith.constant 0 : i32
    %c0_i32_0 = arith.constant 0 : i32
    return %arg0, %c0_i32, %arg1 : i32, i32, i32
  }
  func.func @transform_5(%arg0: i32, %arg1: i32) -> (i32, i32) {
    %c0_i32 = arith.constant 0 : i32
    %c0_i32_0 = arith.constant 0 : i32
    %c0_i32_1 = arith.constant 0 : i32
    return %c0_i32, %c0_i32_0 : i32, i32
  }
  func.func @transform_6(%arg0: i32, %arg1: i32) -> (i32, i32) {
    %c0_i32 = arith.constant 0 : i32
    %c0_i32_0 = arith.constant 0 : i32
    %c0_i32_1 = arith.constant 0 : i32
    return %c0_i32, %c0_i32_0 : i32, i32
  }
  func.func @transform_7(%arg0: i32, %arg1: i32) -> (i32, i32) {
    %c0_i32 = arith.constant 0 : i32
    %c0_i32_0 = arith.constant 0 : i32
    %c0_i32_1 = arith.constant 0 : i32
    return %c0_i32, %c0_i32_0 : i32, i32
  }
  func.func @transform_8(%arg0: i32, %arg1: i32) -> (i32, i32) {
    %c0_i32 = arith.constant 0 : i32
    %c0_i32_0 = arith.constant 0 : i32
    %c0_i32_1 = arith.constant 0 : i32
    return %c0_i32, %c0_i32_0 : i32, i32
  }
  func.func @transform_9(%arg0: i32, %arg1: i32) -> (i32, i32) {
    %c0_i32 = arith.constant 0 : i32
    %c0_i32_0 = arith.constant 0 : i32
    %c0_i32_1 = arith.constant 0 : i32
    return %c0_i32, %c0_i32_0 : i32, i32
  }
  func.func @transform_10(%arg0: i32, %arg1: i32) -> (i32, i32) {
    %c0_i32 = arith.constant 0 : i32
    %c0_i32_0 = arith.constant 0 : i32
    %c0_i32_1 = arith.constant 0 : i32
    return %c0_i32, %c0_i32_0 : i32, i32
  }
  func.func @transform_11(%arg0: i32, %arg1: i32) -> (i32, i32) {
    %c0_i32 = arith.constant 0 : i32
    %c0_i32_0 = arith.constant 0 : i32
    %c0_i32_1 = arith.constant 0 : i32
    return %c0_i32, %c0_i32_0 : i32, i32
  }
  func.func @transform_12(%arg0: i32, %arg1: i32) -> (i32, i32) {
    %c0_i32 = arith.constant 0 : i32
    %c0_i32_0 = arith.constant 0 : i32
    %c0_i32_1 = arith.constant 0 : i32
    return %c0_i32, %c0_i32_0 : i32, i32
  }
  func.func @transform_13(%arg0: i32, %arg1: i32) -> (i32, i32) {
    %c0_i32 = arith.constant 0 : i32
    %c0_i32_0 = arith.constant 0 : i32
    %c0_i32_1 = arith.constant 0 : i32
    return %c0_i32, %c0_i32_0 : i32, i32
  }
  func.func @transform_14(%arg0: i32, %arg1: i32) -> (i32, i32) {
    %c0_i32 = arith.constant 0 : i32
    %c0_i32_0 = arith.constant 0 : i32
    %c0_i32_1 = arith.constant 0 : i32
    return %c0_i32, %c0_i32_0 : i32, i32
  }
  func.func @transform_15(%arg0: i32, %arg1: i32) -> (i32, i32, i32) {
    %c0_i32 = arith.constant 0 : i32
    %c0_i32_0 = arith.constant 0 : i32
    return %arg0, %c0_i32, %arg1 : i32, i32, i32
  }
}

</mosaic_0001>

<llo_original>
// kernel: implicit_shader_forward.1
$region0: #{implicit_shader_forward.1}
  #allocation0 [shape = 'u32[]', space=smem, size = 0x4, offset = 0x4, fixed_abs, tag = 'smem constant byte address 0x4 - core index']
  #allocation1 [shape = 'u32[144,128]{1,0:T(1,128)}', space=vmem, size = 0x12000, scoped, tag = 'internal scratch']
  %s0 = inlined_call_operand.vmem [shape: bf16[2,16,256], index: 0, kind: input, shape index: {}]
  %s1 = inlined_call_operand.vmem [shape: bf16[2,32,256], index: 1, kind: input, shape index: {}]
  %s2 = inlined_call_operand.vmem [shape: bf16[2,16,256], index: 2, kind: input, shape index: {}]
  %s3 = inlined_call_operand.vmem [shape: bf16[2,3,256], index: 3, kind: input, shape index: {}]
  %s4 = inlined_call_operand.vmem [shape: bf16[2,3,256], index: 4, kind: input, shape index: {}]
  %s5 = inlined_call_operand.vmem [shape: bf16[128,16], index: 5, kind: input, shape index: {}]
  %s6 = inlined_call_operand.vmem [shape: bf16[128,32], index: 6, kind: input, shape index: {}]
  %s7 = inlined_call_operand.vmem [shape: bf16[128,16], index: 7, kind: input, shape index: {}]
  %s8 = inlined_call_operand.vmem [shape: bf16[128,3], index: 8, kind: input, shape index: {}]
  %s9 = inlined_call_operand.vmem [shape: bf16[128,3], index: 9, kind: input, shape index: {}]
  %s10 = inlined_call_operand.vmem [shape: f32[128,1], index: 10, kind: input, shape index: {}, may-alias: {10,12}]
  %s11 = inlined_call_operand.vmem [shape: bf16[128,128], index: 11, kind: input, shape index: {}]
  %s12 = inlined_call_operand.vmem [shape: f32[128,1], index: 12, kind: input, shape index: {}, may-alias: {10,12}]
  %s13 = inlined_call_operand.vmem [shape: bf16[8,128], index: 13, kind: input, shape index: {}]
  %s14 = inlined_call_operand.vmem [shape: f32[8,1], index: 14, kind: input, shape index: {}]
  %s15 = inlined_call_operand.vmem [shape: bf16[2,8,256], index: 15, kind: output, shape index: {}]
  %s16 = sld [smem:[#allocation0]]
  $region93: #{implicit_shader_forward.1} parent=0
    _
  %s18 = ssub.s32 1, %s16
  %s19 = scalar_select 0, %s18, %s16
  loop: start=0, step=1, limit=4
  $region2: #{implicit_shader_forward.1} parent=0 // loop_pre_header
    _
  $region3: #{implicit_shader_forward.1} parent=0 // loop_header
    %s21 = sphi 0, %s25
    %p22 = scmp.ge.s32.totalorder %s21, 4
    %s28 = sphi 0, %s40
    %s29 = sphi 0, %s36
    %s30 = sphi 0, %s28
    %s31 = sphi 0, %s29
    %s32 = sphi 0, %s30
    %s33 = sphi 0, %s31
    %s45 = sphi 0, %s47
    %s48 = sphi 0, %s45
    %s49 = sphi 0, %s48
    %s65 = sphi 0, %s49
    %s73 = sphi 0, %s75
    %s76 = sphi 0, %s73
    %s77 = sphi 0, %s76
    %s93 = sphi 0, %s77
    %s101 = sphi 0, %s103
    %s104 = sphi 0, %s101
    %s105 = sphi 0, %s104
    %s121 = sphi 0, %s105
    %s129 = sphi 0, %s131
    %s132 = sphi 0, %s129
    %s133 = sphi 0, %s132
    %s149 = sphi 0, %s133
    %s157 = sphi 0, %s159
    %s160 = sphi 0, %s157
    %s161 = sphi 0, %s160
    %s177 = sphi 0, %s161
    %s181 = sphi 0, %s181
    %s183 = sphi 0, %s181
    %s184 = sphi 0, %s183
    %s198 = sphi 0, %s184
    %s202 = sphi 0, %s202
    %s204 = sphi 0, %s202
    %s205 = sphi 0, %s204
    %s219 = sphi 0, %s205
    %s223 = sphi 0, %s223
    %s225 = sphi 0, %s223
    %s226 = sphi 0, %s225
    %s240 = sphi 0, %s226
    %s244 = sphi 0, %s244
    %s246 = sphi 0, %s244
    %s247 = sphi 0, %s246
    %s261 = sphi 0, %s247
    %s265 = sphi 0, %s265
    %s267 = sphi 0, %s265
    %s268 = sphi 0, %s267
    %s282 = sphi 0, %s268
    %s286 = sphi 0, %s286
    %s288 = sphi 0, %s286
    %s289 = sphi 0, %s288
    %s303 = sphi 0, %s289
    %s307 = sphi 0, %s307
    %s309 = sphi 0, %s307
    %s310 = sphi 0, %s309
    %s324 = sphi 0, %s310
    %s328 = sphi 0, %s328
    %s330 = sphi 0, %s328
    %s331 = sphi 0, %s330
    %s345 = sphi 0, %s331
    %s349 = sphi 0, %s349
    %s351 = sphi 0, %s349
    %s352 = sphi 0, %s351
    %s366 = sphi 0, %s352
    %s370 = sphi 0, %s370
    %s372 = sphi 0, %s370
    %s373 = sphi 0, %s372
    %s387 = sphi 0, %s373
    %s395 = sphi 0, %s397
    %s398 = sphi 0, %s395
    %s399 = sphi 0, %s398
    %s415 = sphi 0, %s399
  $region4: #{implicit_shader_forward.1} parent=0 // loop_header_branch
    %24 = sbr.rel (%p22) target = $region8
  $region5: #{implicit_shader_forward.1} parent=0 // loop_body
    %s26 = ssub.s32 %s21, 1
    %s27 = ssub.s32 %s21, 2
    %s34 = sadd.s32 1, %s29
    %p35 = scmp.ge.s32.totalorder %s34, 1
    %s36 = scalar_select %p35, 0, %s34
    %s37 = sadd.s32 1, %s28
    %s38 = scalar_select %p35, %s37, %s28
    %p39 = scmp.ge.s32.totalorder %s38, 2
    %s40 = scalar_select %p39, 0, %s38
    %s41 = ssub.s32 %s28, %s40
    %s42 = ssub.s32 %s29, %s36
    %s43 = sor.u32 %s41, %s42
    %p44 = scmp.eq.s32.totalorder %s43, 0
    %s46 = sadd.s32 %s45, 1
    %s47 = scalar_select %p44, %s45, %s46
    %p50 = pneg %p44
    %p51 = scmp.eq.s32.totalorder %s21, 1
    %p52 = por %p50, %p51
    %p53 = scmp.ne.s32.totalorder %s45, %s48
    %p54 = scmp.eq.s32.totalorder %s21, 0
    %p55 = por %p53, %p54
    %p56 = scmp.ne.s32.totalorder %s45, %s48
    %p57 = scmp.eq.s32.totalorder %s26, 1
    %p58 = por %p56, %p57
    %p59 = scmp.ne.s32.totalorder %s48, %s49
    %p60 = scmp.eq.s32.totalorder %s26, 0
    %p61 = por %p59, %p60
    %p62 = scmp.ne.s32.totalorder %s48, %s49
    %p63 = scmp.eq.s32.totalorder %s27, 1
    %p64 = por %p62, %p63
    %p66 = scmp.ne.s32.totalorder %s49, %s65
    %p67 = scmp.eq.s32.totalorder %s27, 0
    %p68 = por %p66, %p67
    %s69 = ssub.s32 %s28, %s40
    %s70 = ssub.s32 %s29, %s36
    %s71 = sor.u32 %s69, %s70
    %p72 = scmp.eq.s32.totalorder %s71, 0
    %s74 = sadd.s32 %s73, 1
    %s75 = scalar_select %p72, %s73, %s74
    %p78 = pneg %p72
    %p79 = scmp.eq.s32.totalorder %s21, 1
    %p80 = por %p78, %p79
    %p81 = scmp.ne.s32.totalorder %s73, %s76
    %p82 = scmp.eq.s32.totalorder %s21, 0
    %p83 = por %p81, %p82
    %p84 = scmp.ne.s32.totalorder %s73, %s76
    %p85 = scmp.eq.s32.totalorder %s26, 1
    %p86 = por %p84, %p85
    %p87 = scmp.ne.s32.totalorder %s76, %s77
    %p88 = scmp.eq.s32.totalorder %s26, 0
    %p89 = por %p87, %p88
    %p90 = scmp.ne.s32.totalorder %s76, %s77
    %p91 = scmp.eq.s32.totalorder %s27, 1
    %p92 = por %p90, %p91
    %p94 = scmp.ne.s32.totalorder %s77, %s93
    %p95 = scmp.eq.s32.totalorder %s27, 0
    %p96 = por %p94, %p95
    %s97 = ssub.s32 %s28, %s40
    %s98 = ssub.s32 %s29, %s36
    %s99 = sor.u32 %s97, %s98
    %p100 = scmp.eq.s32.totalorder %s99, 0
    %s102 = sadd.s32 %s101, 1
    %s103 = scalar_select %p100, %s101, %s102
    %p106 = pneg %p100
    %p107 = scmp.eq.s32.totalorder %s21, 1
    %p108 = por %p106, %p107
    %p109 = scmp.ne.s32.totalorder %s101, %s104
    %p110 = scmp.eq.s32.totalorder %s21, 0
    %p111 = por %p109, %p110
    %p112 = scmp.ne.s32.totalorder %s101, %s104
    %p113 = scmp.eq.s32.totalorder %s26, 1
    %p114 = por %p112, %p113
    %p115 = scmp.ne.s32.totalorder %s104, %s105
    %p116 = scmp.eq.s32.totalorder %s26, 0
    %p117 = por %p115, %p116
    %p118 = scmp.ne.s32.totalorder %s104, %s105
    %p119 = scmp.eq.s32.totalorder %s27, 1
    %p120 = por %p118, %p119
    %p122 = scmp.ne.s32.totalorder %s105, %s121
    %p123 = scmp.eq.s32.totalorder %s27, 0
    %p124 = por %p122, %p123
    %s125 = ssub.s32 %s28, %s40
    %s126 = ssub.s32 %s29, %s36
    %s127 = sor.u32 %s125, %s126
    %p128 = scmp.eq.s32.totalorder %s127, 0
    %s130 = sadd.s32 %s129, 1
    %s131 = scalar_select %p128, %s129, %s130
    %p134 = pneg %p128
    %p135 = scmp.eq.s32.totalorder %s21, 1
    %p136 = por %p134, %p135
    %p137 = scmp.ne.s32.totalorder %s129, %s132
    %p138 = scmp.eq.s32.totalorder %s21, 0
    %p139 = por %p137, %p138
    %p140 = scmp.ne.s32.totalorder %s129, %s132
    %p141 = scmp.eq.s32.totalorder %s26, 1
    %p142 = por %p140, %p141
    %p143 = scmp.ne.s32.totalorder %s132, %s133
    %p144 = scmp.eq.s32.totalorder %s26, 0
    %p145 = por %p143, %p144
    %p146 = scmp.ne.s32.totalorder %s132, %s133
    %p147 = scmp.eq.s32.totalorder %s27, 1
    %p148 = por %p146, %p147
    %p150 = scmp.ne.s32.totalorder %s133, %s149
    %p151 = scmp.eq.s32.totalorder %s27, 0
    %p152 = por %p150, %p151
    %s153 = ssub.s32 %s28, %s40
    %s154 = ssub.s32 %s29, %s36
    %s155 = sor.u32 %s153, %s154
    %p156 = scmp.eq.s32.totalorder %s155, 0
    %s158 = sadd.s32 %s157, 1
    %s159 = scalar_select %p156, %s157, %s158
    %p162 = pneg %p156
    %p163 = scmp.eq.s32.totalorder %s21, 1
    %p164 = por %p162, %p163
    %p165 = scmp.ne.s32.totalorder %s157, %s160
    %p166 = scmp.eq.s32.totalorder %s21, 0
    %p167 = por %p165, %p166
    %p168 = scmp.ne.s32.totalorder %s157, %s160
    %p169 = scmp.eq.s32.totalorder %s26, 1
    %p170 = por %p168, %p169
    %p171 = scmp.ne.s32.totalorder %s160, %s161
    %p172 = scmp.eq.s32.totalorder %s26, 0
    %p173 = por %p171, %p172
    %p174 = scmp.ne.s32.totalorder %s160, %s161
    %p175 = scmp.eq.s32.totalorder %s27, 1
    %p176 = por %p174, %p175
    %p178 = scmp.ne.s32.totalorder %s161, %s177
    %p179 = scmp.eq.s32.totalorder %s27, 0
    %p180 = por %p178, %p179
    %s182 = sadd.s32 %s181, 1
    %p185 = scmp.eq.s32.totalorder %s21, 1
    %p186 = scmp.ne.s32.totalorder %s181, %s183
    %p187 = scmp.eq.s32.totalorder %s21, 0
    %p188 = por %p186, %p187
    %p189 = scmp.ne.s32.totalorder %s181, %s183
    %p190 = scmp.eq.s32.totalorder %s26, 1
    %p191 = por %p189, %p190
    %p192 = scmp.ne.s32.totalorder %s183, %s184
    %p193 = scmp.eq.s32.totalorder %s26, 0
    %p194 = por %p192, %p193
    %p195 = scmp.ne.s32.totalorder %s183, %s184
    %p196 = scmp.eq.s32.totalorder %s27, 1
    %p197 = por %p195, %p196
    %p199 = scmp.ne.s32.totalorder %s184, %s198
    %p200 = scmp.eq.s32.totalorder %s27, 0
    %p201 = por %p199, %p200
    %s203 = sadd.s32 %s202, 1
    %p206 = scmp.eq.s32.totalorder %s21, 1
    %p207 = scmp.ne.s32.totalorder %s202, %s204
    %p208 = scmp.eq.s32.totalorder %s21, 0
    %p209 = por %p207, %p208
    %p210 = scmp.ne.s32.totalorder %s202, %s204
    %p211 = scmp.eq.s32.totalorder %s26, 1
    %p212 = por %p210, %p211
    %p213 = scmp.ne.s32.totalorder %s204, %s205
    %p214 = scmp.eq.s32.totalorder %s26, 0
    %p215 = por %p213, %p214
    %p216 = scmp.ne.s32.totalorder %s204, %s205
    %p217 = scmp.eq.s32.totalorder %s27, 1
    %p218 = por %p216, %p217
    %p220 = scmp.ne.s32.totalorder %s205, %s219
    %p221 = scmp.eq.s32.totalorder %s27, 0
    %p222 = por %p220, %p221
    %s224 = sadd.s32 %s223, 1
    %p227 = scmp.eq.s32.totalorder %s21, 1
    %p228 = scmp.ne.s32.totalorder %s223, %s225
    %p229 = scmp.eq.s32.totalorder %s21, 0
    %p230 = por %p228, %p229
    %p231 = scmp.ne.s32.totalorder %s223, %s225
    %p232 = scmp.eq.s32.totalorder %s26, 1
    %p233 = por %p231, %p232
    %p234 = scmp.ne.s32.totalorder %s225, %s226
    %p235 = scmp.eq.s32.totalorder %s26, 0
    %p236 = por %p234, %p235
    %p237 = scmp.ne.s32.totalorder %s225, %s226
    %p238 = scmp.eq.s32.totalorder %s27, 1
    %p239 = por %p237, %p238
    %p241 = scmp.ne.s32.totalorder %s226, %s240
    %p242 = scmp.eq.s32.totalorder %s27, 0
    %p243 = por %p241, %p242
    %s245 = sadd.s32 %s244, 1
    %p248 = scmp.eq.s32.totalorder %s21, 1
    %p249 = scmp.ne.s32.totalorder %s244, %s246
    %p250 = scmp.eq.s32.totalorder %s21, 0
    %p251 = por %p249, %p250
    %p252 = scmp.ne.s32.totalorder %s244, %s246
    %p253 = scmp.eq.s32.totalorder %s26, 1
    %p254 = por %p252, %p253
    %p255 = scmp.ne.s32.totalorder %s246, %s247
    %p256 = scmp.eq.s32.totalorder %s26, 0
    %p257 = por %p255, %p256
    %p258 = scmp.ne.s32.totalorder %s246, %s247
    %p259 = scmp.eq.s32.totalorder %s27, 1
    %p260 = por %p258, %p259
    %p262 = scmp.ne.s32.totalorder %s247, %s261
    %p263 = scmp.eq.s32.totalorder %s27, 0
    %p264 = por %p262, %p263
    %s266 = sadd.s32 %s265, 1
    %p269 = scmp.eq.s32.totalorder %s21, 1
    %p270 = scmp.ne.s32.totalorder %s265, %s267
    %p271 = scmp.eq.s32.totalorder %s21, 0
    %p272 = por %p270, %p271
    %p273 = scmp.ne.s32.totalorder %s265, %s267
    %p274 = scmp.eq.s32.totalorder %s26, 1
    %p275 = por %p273, %p274
    %p276 = scmp.ne.s32.totalorder %s267, %s268
    %p277 = scmp.eq.s32.totalorder %s26, 0
    %p278 = por %p276, %p277
    %p279 = scmp.ne.s32.totalorder %s267, %s268
    %p280 = scmp.eq.s32.totalorder %s27, 1
    %p281 = por %p279, %p280
    %p283 = scmp.ne.s32.totalorder %s268, %s282
    %p284 = scmp.eq.s32.totalorder %s27, 0
    %p285 = por %p283, %p284
    %s287 = sadd.s32 %s286, 1
    %p290 = scmp.eq.s32.totalorder %s21, 1
    %p291 = scmp.ne.s32.totalorder %s286, %s288
    %p292 = scmp.eq.s32.totalorder %s21, 0
    %p293 = por %p291, %p292
    %p294 = scmp.ne.s32.totalorder %s286, %s288
    %p295 = scmp.eq.s32.totalorder %s26, 1
    %p296 = por %p294, %p295
    %p297 = scmp.ne.s32.totalorder %s288, %s289
    %p298 = scmp.eq.s32.totalorder %s26, 0
    %p299 = por %p297, %p298
    %p300 = scmp.ne.s32.totalorder %s288, %s289
    %p301 = scmp.eq.s32.totalorder %s27, 1
    %p302 = por %p300, %p301
    %p304 = scmp.ne.s32.totalorder %s289, %s303
    %p305 = scmp.eq.s32.totalorder %s27, 0
    %p306 = por %p304, %p305
    %s308 = sadd.s32 %s307, 1
    %p311 = scmp.eq.s32.totalorder %s21, 1
    %p312 = scmp.ne.s32.totalorder %s307, %s309
    %p313 = scmp.eq.s32.totalorder %s21, 0
    %p314 = por %p312, %p313
    %p315 = scmp.ne.s32.totalorder %s307, %s309
    %p316 = scmp.eq.s32.totalorder %s26, 1
    %p317 = por %p315, %p316
    %p318 = scmp.ne.s32.totalorder %s309, %s310
    %p319 = scmp.eq.s32.totalorder %s26, 0
    %p320 = por %p318, %p319
    %p321 = scmp.ne.s32.totalorder %s309, %s310
    %p322 = scmp.eq.s32.totalorder %s27, 1
    %p323 = por %p321, %p322
    %p325 = scmp.ne.s32.totalorder %s310, %s324
    %p326 = scmp.eq.s32.totalorder %s27, 0
    %p327 = por %p325, %p326
    %s329 = sadd.s32 %s328, 1
    %p332 = scmp.eq.s32.totalorder %s21, 1
    %p333 = scmp.ne.s32.totalorder %s328, %s330
    %p334 = scmp.eq.s32.totalorder %s21, 0
    %p335 = por %p333, %p334
    %p336 = scmp.ne.s32.totalorder %s328, %s330
    %p337 = scmp.eq.s32.totalorder %s26, 1
    %p338 = por %p336, %p337
    %p339 = scmp.ne.s32.totalorder %s330, %s331
    %p340 = scmp.eq.s32.totalorder %s26, 0
    %p341 = por %p339, %p340
    %p342 = scmp.ne.s32.totalorder %s330, %s331
    %p343 = scmp.eq.s32.totalorder %s27, 1
    %p344 = por %p342, %p343
    %p346 = scmp.ne.s32.totalorder %s331, %s345
    %p347 = scmp.eq.s32.totalorder %s27, 0
    %p348 = por %p346, %p347
    %s350 = sadd.s32 %s349, 1
    %p353 = scmp.eq.s32.totalorder %s21, 1
    %p354 = scmp.ne.s32.totalorder %s349, %s351
    %p355 = scmp.eq.s32.totalorder %s21, 0
    %p356 = por %p354, %p355
    %p357 = scmp.ne.s32.totalorder %s349, %s351
    %p358 = scmp.eq.s32.totalorder %s26, 1
    %p359 = por %p357, %p358
    %p360 = scmp.ne.s32.totalorder %s351, %s352
    %p361 = scmp.eq.s32.totalorder %s26, 0
    %p362 = por %p360, %p361
    %p363 = scmp.ne.s32.totalorder %s351, %s352
    %p364 = scmp.eq.s32.totalorder %s27, 1
    %p365 = por %p363, %p364
    %p367 = scmp.ne.s32.totalorder %s352, %s366
    %p368 = scmp.eq.s32.totalorder %s27, 0
    %p369 = por %p367, %p368
    %s371 = sadd.s32 %s370, 1
    %p374 = scmp.eq.s32.totalorder %s21, 1
    %p375 = scmp.ne.s32.totalorder %s370, %s372
    %p376 = scmp.eq.s32.totalorder %s21, 0
    %p377 = por %p375, %p376
    %p378 = scmp.ne.s32.totalorder %s370, %s372
    %p379 = scmp.eq.s32.totalorder %s26, 1
    %p380 = por %p378, %p379
    %p381 = scmp.ne.s32.totalorder %s372, %s373
    %p382 = scmp.eq.s32.totalorder %s26, 0
    %p383 = por %p381, %p382
    %p384 = scmp.ne.s32.totalorder %s372, %s373
    %p385 = scmp.eq.s32.totalorder %s27, 1
    %p386 = por %p384, %p385
    %p388 = scmp.ne.s32.totalorder %s373, %s387
    %p389 = scmp.eq.s32.totalorder %s27, 0
    %p390 = por %p388, %p389
    %s391 = ssub.s32 %s28, %s40
    %s392 = ssub.s32 %s29, %s36
    %s393 = sor.u32 %s391, %s392
    %p394 = scmp.eq.s32.totalorder %s393, 0
    %s396 = sadd.s32 %s395, 1
    %s397 = scalar_select %p394, %s395, %s396
    %p400 = pneg %p394
    %p401 = scmp.eq.s32.totalorder %s21, 1
    %p402 = por %p400, %p401
    %p403 = scmp.ne.s32.totalorder %s395, %s398
    %p404 = scmp.eq.s32.totalorder %s21, 0
    %p405 = por %p403, %p404
    %p406 = scmp.ne.s32.totalorder %s395, %s398
    %p407 = scmp.eq.s32.totalorder %s26, 1
    %p408 = por %p406, %p407
    %p409 = scmp.ne.s32.totalorder %s398, %s399
    %p410 = scmp.eq.s32.totalorder %s26, 0
    %p411 = por %p409, %p410
    %p412 = scmp.ne.s32.totalorder %s398, %s399
    %p413 = scmp.eq.s32.totalorder %s27, 1
    %p414 = por %p412, %p413
    %p416 = scmp.ne.s32.totalorder %s399, %s415
    %p417 = scmp.eq.s32.totalorder %s27, 0
    %p418 = por %p416, %p417
    %p419 = scmp.le.s32.totalorder 1, %s21
    %p420 = scmp.lt.s32.totalorder %s21, 3
    %p421 = pnand %p419, %p420
    %p422 = pneg %p421
    // Predicated region
    $region9: #{implicit_shader_forward.1} parent=5 // pred_check
      _
    $region10: #{implicit_shader_forward.1} parent=5 // pred_check_branch
      %424 = sbr.rel (%p421) target = $region12
    $region11: #{implicit_shader_forward.1} parent=5 // pred_region
      %s425 = ssub.s32 %s21, 1
      // Predicated region
      $region13: #{implicit_shader_forward.1} parent=11 // pred_check
        %p426 = pneg %p194
      $region14: #{implicit_shader_forward.1} parent=11 // pred_check_branch
        %428 = sbr.rel (%p426) target = $region16
      $region15: #{implicit_shader_forward.1} parent=11 // pred_region
        _
      $region16: #{implicit_shader_forward.1} parent=11 // pred_fallthru
        _
      // Predicated region
      $region17: #{implicit_shader_forward.1} parent=11 // pred_check
        %p429 = pneg %p215
      $region18: #{implicit_shader_forward.1} parent=11 // pred_check_branch
        %431 = sbr.rel (%p429) target = $region20
      $region19: #{implicit_shader_forward.1} parent=11 // pred_region
        _
      $region20: #{implicit_shader_forward.1} parent=11 // pred_fallthru
        _
      // Predicated region
      $region21: #{implicit_shader_forward.1} parent=11 // pred_check
        %p432 = pneg %p236
      $region22: #{implicit_shader_forward.1} parent=11 // pred_check_branch
        %434 = sbr.rel (%p432) target = $region24
      $region23: #{implicit_shader_forward.1} parent=11 // pred_region
        _
      $region24: #{implicit_shader_forward.1} parent=11 // pred_fallthru
        _
      // Predicated region
      $region25: #{implicit_shader_forward.1} parent=11 // pred_check
        %p435 = pneg %p257
      $region26: #{implicit_shader_forward.1} parent=11 // pred_check_branch
        %437 = sbr.rel (%p435) target = $region28
      $region27: #{implicit_shader_forward.1} parent=11 // pred_region
        _
      $region28: #{implicit_shader_forward.1} parent=11 // pred_fallthru
        _
      // Predicated region
      $region29: #{implicit_shader_forward.1} parent=11 // pred_check
        %p438 = pneg %p278
      $region30: #{implicit_shader_forward.1} parent=11 // pred_check_branch
        %440 = sbr.rel (%p438) target = $region32
      $region31: #{implicit_shader_forward.1} parent=11 // pred_region
        _
      $region32: #{implicit_shader_forward.1} parent=11 // pred_fallthru
        _
      // Predicated region
      $region33: #{implicit_shader_forward.1} parent=11 // pred_check
        %p441 = pneg %p299
      $region34: #{implicit_shader_forward.1} parent=11 // pred_check_branch
        %443 = sbr.rel (%p441) target = $region36
      $region35: #{implicit_shader_forward.1} parent=11 // pred_region
        _
      $region36: #{implicit_shader_forward.1} parent=11 // pred_fallthru
        _
      // Predicated region
      $region37: #{implicit_shader_forward.1} parent=11 // pred_check
        %p444 = pneg %p320
      $region38: #{implicit_shader_forward.1} parent=11 // pred_check_branch
        %446 = sbr.rel (%p444) target = $region40
      $region39: #{implicit_shader_forward.1} parent=11 // pred_region
        _
      $region40: #{implicit_shader_forward.1} parent=11 // pred_fallthru
        _
      // Predicated region
      $region41: #{implicit_shader_forward.1} parent=11 // pred_check
        %p447 = pneg %p341
      $region42: #{implicit_shader_forward.1} parent=11 // pred_check_branch
        %449 = sbr.rel (%p447) target = $region44
      $region43: #{implicit_shader_forward.1} parent=11 // pred_region
        _
      $region44: #{implicit_shader_forward.1} parent=11 // pred_fallthru
        _
      // Predicated region
      $region45: #{implicit_shader_forward.1} parent=11 // pred_check
        %p450 = pneg %p362
      $region46: #{implicit_shader_forward.1} parent=11 // pred_check_branch
        %452 = sbr.rel (%p450) target = $region48
      $region47: #{implicit_shader_forward.1} parent=11 // pred_region
        _
      $region48: #{implicit_shader_forward.1} parent=11 // pred_fallthru
        _
      // Predicated region
      $region49: #{implicit_shader_forward.1} parent=11 // pred_check
        %p453 = pneg %p383
      $region50: #{implicit_shader_forward.1} parent=11 // pred_check_branch
        %455 = sbr.rel (%p453) target = $region52
      $region51: #{implicit_shader_forward.1} parent=11 // pred_region
        _
      $region52: #{implicit_shader_forward.1} parent=11 // pred_fallthru
        _
    $region12: #{implicit_shader_forward.1} parent=5 // pred_fallthru
      _
    %p456 = scmp.lt.s32.totalorder %s21, 2
    // Predicated region
    $region53: #{implicit_shader_forward.1} parent=5 // pred_check
      %p457 = pneg %p456
    $region54: #{implicit_shader_forward.1} parent=5 // pred_check_branch
      %459 = sbr.rel (%p457) target = $region56
    $region55: #{implicit_shader_forward.1} parent=5 // pred_region
      // Predicated region
      $region57: #{implicit_shader_forward.1} parent=55 // pred_check
        %p460 = pneg %p55
      $region58: #{implicit_shader_forward.1} parent=55 // pred_check_branch
        %462 = sbr.rel (%p460) target = $region60
      $region59: #{implicit_shader_forward.1} parent=55 // pred_region
        %s463 = smul.u32 2, %s29
        %p464 = scmp.lt.s32.totalorder %s28, 1
        %s465 = scalar_select %p464, %s28, 1
        %p466 = scmp.lt.s32.totalorder %s463, 1
        %s467 = scalar_select %p466, %s463, 1
        %s468 = smul.addr %s465, 4
        %s469 = sadd.s32 %s467, %s468
        %s470 = smul.addr %s469, 4
        %s471 = scalar_lea.vmem %s0, %s470
        %s472 = smul.u32 2, %s29
      $region60: #{implicit_shader_forward.1} parent=55 // pred_fallthru
        _
      // Predicated region
      $region61: #{implicit_shader_forward.1} parent=55 // pred_check
        %p473 = pneg %p83
      $region62: #{implicit_shader_forward.1} parent=55 // pred_check_branch
        %475 = sbr.rel (%p473) target = $region64
      $region63: #{implicit_shader_forward.1} parent=55 // pred_region
        %s476 = smul.u32 2, %s29
        %p477 = scmp.lt.s32.totalorder %s28, 1
        %s478 = scalar_select %p477, %s28, 1
        %p479 = scmp.lt.s32.totalorder %s476, 1
        %s480 = scalar_select %p479, %s476, 1
        %s481 = smul.addr %s478, 8
        %s482 = sadd.s32 %s480, %s481
        %s483 = smul.addr %s482, 4
        %s484 = scalar_lea.vmem %s1, %s483
        %s485 = smul.u32 2, %s29
      $region64: #{implicit_shader_forward.1} parent=55 // pred_fallthru
        _
      // Predicated region
      $region65: #{implicit_shader_forward.1} parent=55 // pred_check
        %p486 = pneg %p111
      $region66: #{implicit_shader_forward.1} parent=55 // pred_check_branch
        %488 = sbr.rel (%p486) target = $region68
      $region67: #{implicit_shader_forward.1} parent=55 // pred_region
        %s489 = smul.u32 2, %s29
        %p490 = scmp.lt.s32.totalorder %s28, 1
        %s491 = scalar_select %p490, %s28, 1
        %p492 = scmp.lt.s32.totalorder %s489, 1
        %s493 = scalar_select %p492, %s489, 1
        %s494 = smul.addr %s491, 4
        %s495 = sadd.s32 %s493, %s494
        %s496 = smul.addr %s495, 4
        %s497 = scalar_lea.vmem %s2, %s496
        %s498 = smul.u32 2, %s29
      $region68: #{implicit_shader_forward.1} parent=55 // pred_fallthru
        _
      // Predicated region
      $region69: #{implicit_shader_forward.1} parent=55 // pred_check
        %p499 = pneg %p139
      $region70: #{implicit_shader_forward.1} parent=55 // pred_check_branch
        %501 = sbr.rel (%p499) target = $region72
      $region71: #{implicit_shader_forward.1} parent=55 // pred_region
        %s502 = smul.u32 2, %s29
        %p503 = scmp.lt.s32.totalorder %s28, 1
        %s504 = scalar_select %p503, %s28, 1
        %p505 = scmp.lt.s32.totalorder %s502, 1
        %s506 = scalar_select %p505, %s502, 1
        %s507 = smul.addr %s504, 2
        %s508 = sadd.s32 %s506, %s507
        %s509 = smul.addr %s508, 2
        %s510 = scalar_lea.vmem %s3, %s509
        %s511 = smul.u32 2, %s29
      $region72: #{implicit_shader_forward.1} parent=55 // pred_fallthru
        _
      // Predicated region
      $region73: #{implicit_shader_forward.1} parent=55 // pred_check
        %p512 = pneg %p167
      $region74: #{implicit_shader_forward.1} parent=55 // pred_check_branch
        %514 = sbr.rel (%p512) target = $region76
      $region75: #{implicit_shader_forward.1} parent=55 // pred_region
        %s515 = smul.u32 2, %s29
        %p516 = scmp.lt.s32.totalorder %s28, 1
        %s517 = scalar_select %p516, %s28, 1
        %p518 = scmp.lt.s32.totalorder %s515, 1
        %s519 = scalar_select %p518, %s515, 1
        %s520 = smul.addr %s517, 2
        %s521 = sadd.s32 %s519, %s520
        %s522 = smul.addr %s521, 2
        %s523 = scalar_lea.vmem %s4, %s522
        %s524 = smul.u32 2, %s29
      $region76: #{implicit_shader_forward.1} parent=55 // pred_fallthru
        _
    $region56: #{implicit_shader_forward.1} parent=5 // pred_fallthru
      _
    %p525 = scmp.le.s32.totalorder 1, %s21
    %p526 = scmp.lt.s32.totalorder %s21, 3
    %p527 = pnand %p525, %p526
    %p528 = pneg %p527
    // Predicated region
    $region77: #{implicit_shader_forward.1} parent=5 // pred_check
      _
    $region78: #{implicit_shader_forward.1} parent=5 // pred_check_branch
      %530 = sbr.rel (%p527) target = $region80
    $region79: #{implicit_shader_forward.1} parent=5 // pred_region
      %s531 = ssub.s32 %s21, 1
      %s532 = smul.u32 2, %s31
      %p533 = scmp.lt.s32.totalorder %s30, 1
      %s534 = scalar_select %p533, %s30, 1
      %p535 = scmp.lt.s32.totalorder %s532, 1
      %s536 = scalar_select %p535, %s532, 1
      %s537 = smul.addr %s534, 4
      %s538 = sadd.s32 %s536, %s537
      %s539 = smul.addr %s538, 4
      %s540 = scalar_lea.vmem %s0, %s539
      %p541 = pneg %p61
      %p542 = pneg %p58
      %s543 = smul.u32 2, %s31
      %p544 = scmp.lt.s32.totalorder %s30, 1
      %s545 = scalar_select %p544, %s30, 1
      %p546 = scmp.lt.s32.totalorder %s543, 1
      %s547 = scalar_select %p546, %s543, 1
      %s548 = smul.addr %s545, 8
      %s549 = sadd.s32 %s547, %s548
      %s550 = smul.addr %s549, 4
      %s551 = scalar_lea.vmem %s1, %s550
      %p552 = pneg %p89
      %p553 = pneg %p86
      %s554 = smul.u32 2, %s31
      %p555 = scmp.lt.s32.totalorder %s30, 1
      %s556 = scalar_select %p555, %s30, 1
      %p557 = scmp.lt.s32.totalorder %s554, 1
      %s558 = scalar_select %p557, %s554, 1
      %s559 = smul.addr %s556, 4
      %s560 = sadd.s32 %s558, %s559
      %s561 = smul.addr %s560, 4
      %s562 = scalar_lea.vmem %s2, %s561
      %p563 = pneg %p117
      %p564 = pneg %p114
      %s565 = smul.u32 2, %s31
      %p566 = scmp.lt.s32.totalorder %s30, 1
      %s567 = scalar_select %p566, %s30, 1
      %p568 = scmp.lt.s32.totalorder %s565, 1
      %s569 = scalar_select %p568, %s565, 1
      %s570 = smul.addr %s567, 2
      %s571 = sadd.s32 %s569, %s570
      %s572 = smul.addr %s571, 2
      %s573 = scalar_lea.vmem %s3, %s572
      %p574 = pneg %p145
      %p575 = pneg %p142
      %s576 = smul.u32 2, %s31
      %p577 = scmp.lt.s32.totalorder %s30, 1
      %s578 = scalar_select %p577, %s30, 1
      %p579 = scmp.lt.s32.totalorder %s576, 1
      %s580 = scalar_select %p579, %s576, 1
      %s581 = smul.addr %s578, 2
      %s582 = sadd.s32 %s580, %s581
      %s583 = smul.addr %s582, 2
      %s584 = scalar_lea.vmem %s4, %s583
      %p585 = pneg %p173
      %p586 = pneg %p170
      %p587 = pneg %p194
      %p588 = pneg %p191
      %p589 = pneg %p215
      %p590 = pneg %p212
      %p591 = pneg %p236
      %p592 = pneg %p233
      %p593 = pneg %p257
      %p594 = pneg %p254
      %p595 = pneg %p278
      %p596 = pneg %p275
      %p597 = pneg %p299
      %p598 = pneg %p296
      %p599 = pneg %p320
      %p600 = pneg %p317
      %p601 = pneg %p341
      %p602 = pneg %p338
      %p603 = pneg %p362
      %p604 = pneg %p359
      %p605 = pneg %p383
      %p606 = pneg %p380
      %p607 = pneg %p411
      %p608 = pneg %p408
      %s609 = smul.u32 2, %s31
      %p610 = scmp.lt.s32.totalorder %s30, 1
      %s611 = scalar_select %p610, %s30, 1
      %p612 = scmp.lt.s32.totalorder %s609, 1
      %s613 = scalar_select %p612, %s609, 1
      %s614 = smul.addr %s611, 2
      %s615 = sadd.s32 %s613, %s614
      %s616 = smul.addr %s615, 4
      %s617 = scalar_lea.vmem %s15, %s616
      %s618 = smul.u32 2, %s31
      %p619 = scmp.lt.s32.totalorder %s30, 1
      %s620 = scalar_select %p619, %s30, 1
      %p621 = scmp.lt.s32.totalorder %s618, 1
      %s622 = scalar_select %p621, %s618, 1
      %s623 = smul.addr %s620, 4
      %s624 = sadd.s32 %s622, %s623
      %s625 = smul.addr %s624, 4
      %s626 = scalar_lea.vmem %s0, %s625
      %s627 = smul.u32 2, %s31
      %s628 = smul.u32 2, %s31
      %p629 = scmp.lt.s32.totalorder %s30, 1
      %s630 = scalar_select %p629, %s30, 1
      %p631 = scmp.lt.s32.totalorder %s628, 1
      %s632 = scalar_select %p631, %s628, 1
      %s633 = smul.addr %s630, 8
      %s634 = sadd.s32 %s632, %s633
      %s635 = smul.addr %s634, 4
      %s636 = scalar_lea.vmem %s1, %s635
      %s637 = smul.u32 2, %s31
      %s638 = smul.u32 2, %s31
      %p639 = scmp.lt.s32.totalorder %s30, 1
      %s640 = scalar_select %p639, %s30, 1
      %p641 = scmp.lt.s32.totalorder %s638, 1
      %s642 = scalar_select %p641, %s638, 1
      %s643 = smul.addr %s640, 4
      %s644 = sadd.s32 %s642, %s643
      %s645 = smul.addr %s644, 4
      %s646 = scalar_lea.vmem %s2, %s645
      %s647 = smul.u32 2, %s31
      %s648 = smul.u32 2, %s31
      %p649 = scmp.lt.s32.totalorder %s30, 1
      %s650 = scalar_select %p649, %s30, 1
      %p651 = scmp.lt.s32.totalorder %s648, 1
      %s652 = scalar_select %p651, %s648, 1
      %s653 = smul.addr %s650, 2
      %s654 = sadd.s32 %s652, %s653
      %s655 = smul.addr %s654, 2
      %s656 = scalar_lea.vmem %s3, %s655
      %s657 = smul.u32 2, %s31
      %s658 = smul.u32 2, %s31
      %p659 = scmp.lt.s32.totalorder %s30, 1
      %s660 = scalar_select %p659, %s30, 1
      %p661 = scmp.lt.s32.totalorder %s658, 1
      %s662 = scalar_select %p661, %s658, 1
      %s663 = smul.addr %s660, 2
      %s664 = sadd.s32 %s662, %s663
      %s665 = smul.addr %s664, 2
      %s666 = scalar_lea.vmem %s4, %s665
      %s667 = smul.u32 2, %s31
      %s668 = smul.u32 2, %s31
      %p669 = scmp.lt.s32.totalorder %s30, 1
      %s670 = scalar_select %p669, %s30, 1
      %p671 = scmp.lt.s32.totalorder %s668, 1
      %s672 = scalar_select %p671, %s668, 1
      %s673 = smul.addr %s670, 2
      %s674 = sadd.s32 %s672, %s673
      %s675 = smul.addr %s674, 4
      %s676 = scalar_lea.vmem %s15, %s675
      %s677 = smul.u32 2, %s31
      %v679 = vld [vmem:[%s5] sm:$0xf]
      %v680 = vld [vmem:[%s5 + $0x4] sm:$0xf]
      %v681 = vld [vmem:[%s5 + $0x8] sm:$0xf]
      %v682 = vld [vmem:[%s5 + $0xc] sm:$0xf]
      %v683 = vld [vmem:[%s5 + $0x10] sm:$0xf]
      %v684 = vld [vmem:[%s5 + $0x14] sm:$0xf]
      %v685 = vld [vmem:[%s5 + $0x18] sm:$0xf]
      %v686 = vld [vmem:[%s5 + $0x1c] sm:$0xf]
      %v687 = vld [vmem:[%s5 + $0x20] sm:$0xf]
      %v688 = vld [vmem:[%s5 + $0x24] sm:$0xf]
      %v689 = vld [vmem:[%s5 + $0x28] sm:$0xf]
      %v690 = vld [vmem:[%s5 + $0x2c] sm:$0xf]
      %v691 = vld [vmem:[%s5 + $0x30] sm:$0xf]
      %v692 = vld [vmem:[%s5 + $0x34] sm:$0xf]
      %v693 = vld [vmem:[%s5 + $0x38] sm:$0xf]
      %v694 = vld [vmem:[%s5 + $0x3c] sm:$0xf]
      %v695 = vld [vmem:[%s626] sm:$0xff]
      %v696 = vld [vmem:[%s626 + $0x8] sm:$0xff]
      %v697 = vld [vmem:[%s6] sm:$0xf]
      %v698 = vld [vmem:[%s6 + $0x4] sm:$0xf]
      %v699 = vld [vmem:[%s6 + $0x8] sm:$0xf]
      %v700 = vld [vmem:[%s6 + $0xc] sm:$0xf]
      %v701 = vld [vmem:[%s6 + $0x10] sm:$0xf]
      %v702 = vld [vmem:[%s6 + $0x14] sm:$0xf]
      %v703 = vld [vmem:[%s6 + $0x18] sm:$0xf]
      %v704 = vld [vmem:[%s6 + $0x1c] sm:$0xf]
      %v705 = vld [vmem:[%s6 + $0x20] sm:$0xf]
      %v706 = vld [vmem:[%s6 + $0x24] sm:$0xf]
      %v707 = vld [vmem:[%s6 + $0x28] sm:$0xf]
      %v708 = vld [vmem:[%s6 + $0x2c] sm:$0xf]
      %v709 = vld [vmem:[%s6 + $0x30] sm:$0xf]
      %v710 = vld [vmem:[%s6 + $0x34] sm:$0xf]
      %v711 = vld [vmem:[%s6 + $0x38] sm:$0xf]
      %v712 = vld [vmem:[%s6 + $0x3c] sm:$0xf]
      %v713 = vld [vmem:[%s636] sm:$0xff]
      %v714 = vld [vmem:[%s636 + $0x8] sm:$0xff]
      %v715 = vld [vmem:[%s636 + $0x10] sm:$0xff]
      %v716 = vld [vmem:[%s636 + $0x18] sm:$0xff]
      %v733 = vunpack.c.l.b16 %v697
      %v734 = vunpack.c.l.b16 %v698
      %v735 = vunpack.c.l.b16 %v699
      %v736 = vunpack.c.l.b16 %v700
      %v737 = vunpack.c.l.b16 %v701
      %v738 = vunpack.c.l.b16 %v702
      %v739 = vunpack.c.l.b16 %v703
      %v740 = vunpack.c.l.b16 %v704
      %v741 = vunpack.c.l.b16 %v705
      %v742 = vunpack.c.l.b16 %v706
      %v743 = vunpack.c.l.b16 %v707
      %v744 = vunpack.c.l.b16 %v708
      %v745 = vunpack.c.l.b16 %v709
      %v746 = vunpack.c.l.b16 %v710
      %v747 = vunpack.c.l.b16 %v711
      %v748 = vunpack.c.l.b16 %v712
      %v749 = vpack.c.b16 %v734, %v733
      %v750 = vpack.c.b16 %v736, %v735
      %v751 = vpack.c.b16 %v738, %v737
      %v752 = vpack.c.b16 %v740, %v739
      %v753 = vpack.c.b16 %v742, %v741
      %v754 = vpack.c.b16 %v744, %v743
      %v755 = vpack.c.b16 %v746, %v745
      %v756 = vpack.c.b16 %v748, %v747
      %v761 = vunpack.c.l.b16 %v713
      %v762 = vunpack.c.h.b16 %v713
      %v763 = vunpack.c.l.b16 %v714
      %v764 = vunpack.c.h.b16 %v714
      %v765 = vunpack.c.l.b16 %v715
      %v766 = vunpack.c.h.b16 %v715
      %v767 = vunpack.c.l.b16 %v716
      %v768 = vunpack.c.h.b16 %v716
      %v769 = vpack.c.b16 %v763, %v761
      %v770 = vpack.c.b16 %v764, %v762
      %v771 = vpack.c.b16 %v767, %v765
      %v772 = vpack.c.b16 %v768, %v766
      %vm777 = vcmask 261120
      %v779 = vsel %vm777, %v749, 0
      %v782 = vsel %vm777, %v750, 0
      %v785 = vsel %vm777, %v751, 0
      %v788 = vsel %vm777, %v752, 0
      %v791 = vsel %vm777, %v753, 0
      %v794 = vsel %vm777, %v754, 0
      %v797 = vsel %vm777, %v755, 0
      %v800 = vsel %vm777, %v756, 0
      %802 = vmatprep.subr.bf16.mxu0 %v770
      %803 = vmatpush1.bf16.msra.mxu0 %v769
      %804 = vmatprep.subr.bf16.mxu0 %v772
      %805 = vmatpush1.bf16.msra.mxu0 %v771
      %806 = vmatprep.subr.bf16.mxu0 0
      %807 = vmatpush1.bf16.msra.mxu0 0
      %808 = vmatprep.subr.bf16.mxu0 0
      %809 = vmatpush1.bf16.msra.mxu0 0
      %810 = vmatprep.subr.bf16.mxu0 0
      %811 = vmatpush1.bf16.msra.mxu0 0
      %812 = vmatprep.subr.bf16.mxu0 0
      %813 = vmatpush1.bf16.msra.mxu0 0
      %814 = vmatprep.subr.bf16.mxu0 0
      %815 = vmatpush1.bf16.msra.mxu0 0
      %816 = vmatprep.subr.bf16.mxu0 0
      %817 = vmatpush1.bf16.msra.mxu0 0
      %818 = vmatprep.subr.bf16.mxu0 0
      %819 = vmatpush1.bf16.msra.mxu0 0
      %820 = vmatprep.subr.bf16.mxu0 0
      %821 = vmatpush1.bf16.msra.mxu0 0
      %822 = vmatprep.subr.bf16.mxu0 0
      %823 = vmatpush1.bf16.msra.mxu0 0
      %824 = vmatprep.subr.bf16.mxu0 0
      %825 = vmatpush1.bf16.msra.mxu0 0
      %826 = vmatprep.subr.bf16.mxu0 0
      %827 = vmatpush1.bf16.msra.mxu0 0
      %828 = vmatprep.subr.bf16.mxu0 0
      %829 = vmatpush1.bf16.msra.mxu0 0
      %830 = vmatprep.subr.bf16.mxu0 0
      %831 = vmatpush1.bf16.msra.mxu0 0
      %832 = vmatprep.subr.bf16.mxu0 0
      %833 = vmatpush1.bf16.msra.mxu0 0
      %834 = vmatprep.mubr.bf16.mxu0 0
      %835 = vmatmul.mubr.bf16.gmra.mrb[0].mxu0 %v779
      %v836 = vpop.f32.mrb[0].mxu0
      %v837 = vadd.f32 0.0, %v836
      %v838 = vpop.f32.mrb[0].mxu0
      %v839 = vadd.f32 0.0, %v838
      %v840 = vpop.f32.mrb[0].mxu0
      %v841 = vadd.f32 0.0, %v840
      %v842 = vpop.f32.mrb[0].mxu0
      %v843 = vadd.f32 0.0, %v842
      %844 = vmatprep.mubr.bf16.mxu0 0
      %845 = vmatmul.mubr.bf16.gmra.mrb[0].mxu0 %v782
      %v846 = vpop.f32.mrb[0].mxu0
      %v847 = vadd.f32 0.0, %v846
      %v848 = vpop.f32.mrb[0].mxu0
      %v849 = vadd.f32 0.0, %v848
      %v850 = vpop.f32.mrb[0].mxu0
      %v851 = vadd.f32 0.0, %v850
      %v852 = vpop.f32.mrb[0].mxu0
      %v853 = vadd.f32 0.0, %v852
      %854 = vmatprep.mubr.bf16.mxu0 0
      %855 = vmatmul.mubr.bf16.gmra.mrb[0].mxu0 %v785
      %v856 = vpop.f32.mrb[0].mxu0
      %v857 = vadd.f32 0.0, %v856
      %v858 = vpop.f32.mrb[0].mxu0
      %v859 = vadd.f32 0.0, %v858
      %v860 = vpop.f32.mrb[0].mxu0
      %v861 = vadd.f32 0.0, %v860
      %v862 = vpop.f32.mrb[0].mxu0
      %v863 = vadd.f32 0.0, %v862
      %864 = vmatprep.mubr.bf16.mxu0 0
      %865 = vmatmul.mubr.bf16.gmra.mrb[0].mxu0 %v788
      %v866 = vpop.f32.mrb[0].mxu0
      %v867 = vadd.f32 0.0, %v866
      %v868 = vpop.f32.mrb[0].mxu0
      %v869 = vadd.f32 0.0, %v868
      %v870 = vpop.f32.mrb[0].mxu0
      %v871 = vadd.f32 0.0, %v870
      %v872 = vpop.f32.mrb[0].mxu0
      %v873 = vadd.f32 0.0, %v872
      %874 = vmatprep.mubr.bf16.mxu0 0
      %875 = vmatmul.mubr.bf16.gmra.mrb[0].mxu0 %v791
      %v876 = vpop.f32.mrb[0].mxu0
      %v877 = vadd.f32 0.0, %v876
      %v878 = vpop.f32.mrb[0].mxu0
      %v879 = vadd.f32 0.0, %v878
      %v880 = vpop.f32.mrb[0].mxu0
      %v881 = vadd.f32 0.0, %v880
      %v882 = vpop.f32.mrb[0].mxu0
      %v883 = vadd.f32 0.0, %v882
      %884 = vmatprep.mubr.bf16.mxu0 0
      %885 = vmatmul.mubr.bf16.gmra.mrb[0].mxu0 %v794
      %v886 = vpop.f32.mrb[0].mxu0
      %v887 = vadd.f32 0.0, %v886
      %v888 = vpop.f32.mrb[0].mxu0
      %v889 = vadd.f32 0.0, %v888
      %v890 = vpop.f32.mrb[0].mxu0
      %v891 = vadd.f32 0.0, %v890
      %v892 = vpop.f32.mrb[0].mxu0
      %v893 = vadd.f32 0.0, %v892
      %894 = vmatprep.mubr.bf16.mxu0 0
      %895 = vmatmul.mubr.bf16.gmra.mrb[0].mxu0 %v797
      %v896 = vpop.f32.mrb[0].mxu0
      %v897 = vadd.f32 0.0, %v896
      %v898 = vpop.f32.mrb[0].mxu0
      %v899 = vadd.f32 0.0, %v898
      %v900 = vpop.f32.mrb[0].mxu0
      %v901 = vadd.f32 0.0, %v900
      %v902 = vpop.f32.mrb[0].mxu0
      %v903 = vadd.f32 0.0, %v902
      %904 = vmatprep.mubr.bf16.mxu0 0
      %905 = vmatmul.mubr.bf16.gmra.mrb[0].mxu0 %v800
      %v906 = vpop.f32.mrb[0].mxu0
      %v907 = vadd.f32 0.0, %v906
      %v908 = vpop.f32.mrb[0].mxu0
      %v909 = vadd.f32 0.0, %v908
      %v910 = vpop.f32.mrb[0].mxu0
      %v911 = vadd.f32 0.0, %v910
      %v912 = vpop.f32.mrb[0].mxu0
      %v913 = vadd.f32 0.0, %v912
      %914 = vdwg.mxu0
      %v931 = vunpack.c.l.b16 %v679
      %v932 = vunpack.c.l.b16 %v680
      %v933 = vunpack.c.l.b16 %v681
      %v934 = vunpack.c.l.b16 %v682
      %v935 = vunpack.c.l.b16 %v683
      %v936 = vunpack.c.l.b16 %v684
      %v937 = vunpack.c.l.b16 %v685
      %v938 = vunpack.c.l.b16 %v686
      %v939 = vunpack.c.l.b16 %v687
      %v940 = vunpack.c.l.b16 %v688
      %v941 = vunpack.c.l.b16 %v689
      %v942 = vunpack.c.l.b16 %v690
      %v943 = vunpack.c.l.b16 %v691
      %v944 = vunpack.c.l.b16 %v692
      %v945 = vunpack.c.l.b16 %v693
      %v946 = vunpack.c.l.b16 %v694
      %v947 = vpack.c.b16 %v932, %v931
      %v948 = vpack.c.b16 %v934, %v933
      %v949 = vpack.c.b16 %v936, %v935
      %v950 = vpack.c.b16 %v938, %v937
      %v951 = vpack.c.b16 %v940, %v939
      %v952 = vpack.c.b16 %v942, %v941
      %v953 = vpack.c.b16 %v944, %v943
      %v954 = vpack.c.b16 %v946, %v945
      %v957 = vunpack.c.l.b16 %v695
      %v958 = vunpack.c.h.b16 %v695
      %v959 = vunpack.c.l.b16 %v696
      %v960 = vunpack.c.h.b16 %v696
      %v961 = vpack.c.b16 %v959, %v957
      %v962 = vpack.c.b16 %v960, %v958
      %vm965 = vcmask 130048
      %v967 = vsel %vm965, %v947, 0
      %v970 = vsel %vm965, %v948, 0
      %v973 = vsel %vm965, %v949, 0
      %v976 = vsel %vm965, %v950, 0
      %v979 = vsel %vm965, %v951, 0
      %v982 = vsel %vm965, %v952, 0
      %v985 = vsel %vm965, %v953, 0
      %v988 = vsel %vm965, %v954, 0
      %990 = vmatprep.subr.bf16.mxu0 %v962
      %991 = vmatpush1.bf16.msra.mxu0 %v961
      %992 = vmatprep.subr.bf16.mxu0 0
      %993 = vmatpush1.bf16.msra.mxu0 0
      %994 = vmatprep.subr.bf16.mxu0 0
      %995 = vmatpush1.bf16.msra.mxu0 0
      %996 = vmatprep.subr.bf16.mxu0 0
      %997 = vmatpush1.bf16.msra.mxu0 0
      %998 = vmatprep.subr.bf16.mxu0 0
      %999 = vmatpush1.bf16.msra.mxu0 0
      %1000 = vmatprep.subr.bf16.mxu0 0
      %1001 = vmatpush1.bf16.msra.mxu0 0
      %1002 = vmatprep.subr.bf16.mxu0 0
      %1003 = vmatpush1.bf16.msra.mxu0 0
      %1004 = vmatprep.subr.bf16.mxu0 0
      %1005 = vmatpush1.bf16.msra.mxu0 0
      %1006 = vmatprep.subr.bf16.mxu0 0
      %1007 = vmatpush1.bf16.msra.mxu0 0
      %1008 = vmatprep.subr.bf16.mxu0 0
      %1009 = vmatpush1.bf16.msra.mxu0 0
      %1010 = vmatprep.subr.bf16.mxu0 0
      %1011 = vmatpush1.bf16.msra.mxu0 0
      %1012 = vmatprep.subr.bf16.mxu0 0
      %1013 = vmatpush1.bf16.msra.mxu0 0
      %1014 = vmatprep.subr.bf16.mxu0 0
      %1015 = vmatpush1.bf16.msra.mxu0 0
      %1016 = vmatprep.subr.bf16.mxu0 0
      %1017 = vmatpush1.bf16.msra.mxu0 0
      %1018 = vmatprep.subr.bf16.mxu0 0
      %1019 = vmatpush1.bf16.msra.mxu0 0
      %1020 = vmatprep.subr.bf16.mxu0 0
      %1021 = vmatpush1.bf16.msra.mxu0 0
      %1022 = vmatprep.mubr.bf16.mxu0 0
      %1023 = vmatmul.mubr.bf16.gmra.mrb[0].mxu0 %v967
      %v1024 = vpop.f32.mrb[0].mxu0
      %v1025 = vadd.f32 %v837, %v1024
      %v1026 = vpop.f32.mrb[0].mxu0
      %v1027 = vadd.f32 %v839, %v1026
      %v1028 = vpop.f32.mrb[0].mxu0
      %v1029 = vadd.f32 %v841, %v1028
      %v1030 = vpop.f32.mrb[0].mxu0
      %v1031 = vadd.f32 %v843, %v1030
      %1032 = vmatprep.mubr.bf16.mxu0 0
      %1033 = vmatmul.mubr.bf16.gmra.mrb[0].mxu0 %v970
      %v1034 = vpop.f32.mrb[0].mxu0
      %v1035 = vadd.f32 %v847, %v1034
      %v1036 = vpop.f32.mrb[0].mxu0
      %v1037 = vadd.f32 %v849, %v1036
      %v1038 = vpop.f32.mrb[0].mxu0
      %v1039 = vadd.f32 %v851, %v1038
      %v1040 = vpop.f32.mrb[0].mxu0
      %v1041 = vadd.f32 %v853, %v1040
      %1042 = vmatprep.mubr.bf16.mxu0 0
      %1043 = vmatmul.mubr.bf16.gmra.mrb[0].mxu0 %v973
      %v1044 = vpop.f32.mrb[0].mxu0
      %v1045 = vadd.f32 %v857, %v1044
      %v1046 = vpop.f32.mrb[0].mxu0
      %v1047 = vadd.f32 %v859, %v1046
      %v1048 = vpop.f32.mrb[0].mxu0
      %v1049 = vadd.f32 %v861, %v1048
      %v1050 = vpop.f32.mrb[0].mxu0
      %v1051 = vadd.f32 %v863, %v1050
      %1052 = vmatprep.mubr.bf16.mxu0 0
      %1053 = vmatmul.mubr.bf16.gmra.mrb[0].mxu0 %v976
      %v1054 = vpop.f32.mrb[0].mxu0
      %v1055 = vadd.f32 %v867, %v1054
      %v1056 = vpop.f32.mrb[0].mxu0
      %v1057 = vadd.f32 %v869, %v1056
      %v1058 = vpop.f32.mrb[0].mxu0
      %v1059 = vadd.f32 %v871, %v1058
      %v1060 = vpop.f32.mrb[0].mxu0
      %v1061 = vadd.f32 %v873, %v1060
      %1062 = vmatprep.mubr.bf16.mxu0 0
      %1063 = vmatmul.mubr.bf16.gmra.mrb[0].mxu0 %v979
      %v1064 = vpop.f32.mrb[0].mxu0
      %v1065 = vadd.f32 %v877, %v1064
      %v1066 = vpop.f32.mrb[0].mxu0
      %v1067 = vadd.f32 %v879, %v1066
      %v1068 = vpop.f32.mrb[0].mxu0
      %v1069 = vadd.f32 %v881, %v1068
      %v1070 = vpop.f32.mrb[0].mxu0
      %v1071 = vadd.f32 %v883, %v1070
      %1072 = vmatprep.mubr.bf16.mxu0 0
      %1073 = vmatmul.mubr.bf16.gmra.mrb[0].mxu0 %v982
      %v1074 = vpop.f32.mrb[0].mxu0
      %v1075 = vadd.f32 %v887, %v1074
      %v1076 = vpop.f32.mrb[0].mxu0
      %v1077 = vadd.f32 %v889, %v1076
      %v1078 = vpop.f32.mrb[0].mxu0
      %v1079 = vadd.f32 %v891, %v1078
      %v1080 = vpop.f32.mrb[0].mxu0
      %v1081 = vadd.f32 %v893, %v1080
      %1082 = vmatprep.mubr.bf16.mxu0 0
      %1083 = vmatmul.mubr.bf16.gmra.mrb[0].mxu0 %v985
      %v1084 = vpop.f32.mrb[0].mxu0
      %v1085 = vadd.f32 %v897, %v1084
      %v1086 = vpop.f32.mrb[0].mxu0
      %v1087 = vadd.f32 %v899, %v1086
      %v1088 = vpop.f32.mrb[0].mxu0
      %v1089 = vadd.f32 %v901, %v1088
      %v1090 = vpop.f32.mrb[0].mxu0
      %v1091 = vadd.f32 %v903, %v1090
      %1092 = vmatprep.mubr.bf16.mxu0 0
      %1093 = vmatmul.mubr.bf16.gmra.mrb[0].mxu0 %v988
      %v1094 = vpop.f32.mrb[0].mxu0
      %v1095 = vadd.f32 %v907, %v1094
      %v1096 = vpop.f32.mrb[0].mxu0
      %v1097 = vadd.f32 %v909, %v1096
      %v1098 = vpop.f32.mrb[0].mxu0
      %v1099 = vadd.f32 %v911, %v1098
      %v1100 = vpop.f32.mrb[0].mxu0
      %v1101 = vadd.f32 %v913, %v1100
      %1102 = vdwg.mxu0
      %v1103 = vld [vmem:[%s7] sm:$0xf]
      %v1104 = vld [vmem:[%s7 + $0x4] sm:$0xf]
      %v1105 = vld [vmem:[%s7 + $0x8] sm:$0xf]
      %v1106 = vld [vmem:[%s7 + $0xc] sm:$0xf]
      %v1107 = vld [vmem:[%s7 + $0x10] sm:$0xf]
      %v1108 = vld [vmem:[%s7 + $0x14] sm:$0xf]
      %v1109 = vld [vmem:[%s7 + $0x18] sm:$0xf]
      %v1110 = vld [vmem:[%s7 + $0x1c] sm:$0xf]
      %v1111 = vld [vmem:[%s7 + $0x20] sm:$0xf]
      %v1112 = vld [vmem:[%s7 + $0x24] sm:$0xf]
      %v1113 = vld [vmem:[%s7 + $0x28] sm:$0xf]
      %v1114 = vld [vmem:[%s7 + $0x2c] sm:$0xf]
      %v1115 = vld [vmem:[%s7 + $0x30] sm:$0xf]
      %v1116 = vld [vmem:[%s7 + $0x34] sm:$0xf]
      %v1117 = vld [vmem:[%s7 + $0x38] sm:$0xf]
      %v1118 = vld [vmem:[%s7 + $0x3c] sm:$0xf]
      %v1119 = vld [vmem:[%s646] sm:$0xff]
      %v1120 = vld [vmem:[%s646 + $0x8] sm:$0xff]
      %v1137 = vunpack.c.l.b16 %v1103
      %v1138 = vunpack.c.l.b16 %v1104
      %v1139 = vunpack.c.l.b16 %v1105
      %v1140 = vunpack.c.l.b16 %v1106
      %v1141 = vunpack.c.l.b16 %v1107
      %v1142 = vunpack.c.l.b16 %v1108
      %v1143 = vunpack.c.l.b16 %v1109
      %v1144 = vunpack.c.l.b16 %v1110
      %v1145 = vunpack.c.l.b16 %v1111
      %v1146 = vunpack.c.l.b16 %v1112
      %v1147 = vunpack.c.l.b16 %v1113
      %v1148 = vunpack.c.l.b16 %v1114
      %v1149 = vunpack.c.l.b16 %v1115
      %v1150 = vunpack.c.l.b16 %v1116
      %v1151 = vunpack.c.l.b16 %v1117
      %v1152 = vunpack.c.l.b16 %v1118
      %v1153 = vpack.c.b16 %v1138, %v1137
      %v1154 = vpack.c.b16 %v1140, %v1139
      %v1155 = vpack.c.b16 %v1142, %v1141
      %v1156 = vpack.c.b16 %v1144, %v1143
      %v1157 = vpack.c.b16 %v1146, %v1145
      %v1158 = vpack.c.b16 %v1148, %v1147
      %v1159 = vpack.c.b16 %v1150, %v1149
      %v1160 = vpack.c.b16 %v1152, %v1151
      %v1163 = vunpack.c.l.b16 %v1119
      %v1164 = vunpack.c.h.b16 %v1119
      %v1165 = vunpack.c.l.b16 %v1120
      %v1166 = vunpack.c.h.b16 %v1120
      %v1167 = vpack.c.b16 %v1165, %v1163
      %v1168 = vpack.c.b16 %v1166, %v1164
      %v1172 = vsel %vm965, %v1153, 0
      %v1175 = vsel %vm965, %v1154, 0
      %v1178 = vsel %vm965, %v1155, 0
      %v1181 = vsel %vm965, %v1156, 0
      %v1184 = vsel %vm965, %v1157, 0
      %v1187 = vsel %vm965, %v1158, 0
      %v1190 = vsel %vm965, %v1159, 0
      %v1193 = vsel %vm965, %v1160, 0
      %1195 = vmatprep.subr.bf16.mxu0 %v1168
      %1196 = vmatpush1.bf16.msra.mxu0 %v1167
      %1197 = vmatprep.subr.bf16.mxu0 0
      %1198 = vmatpush1.bf16.msra.mxu0 0
      %1199 = vmatprep.subr.bf16.mxu0 0
      %1200 = vmatpush1.bf16.msra.mxu0 0
      %1201 = vmatprep.subr.bf16.mxu0 0
      %1202 = vmatpush1.bf16.msra.mxu0 0
      %1203 = vmatprep.subr.bf16.mxu0 0
      %1204 = vmatpush1.bf16.msra.mxu0 0
      %1205 = vmatprep.subr.bf16.mxu0 0
      %1206 = vmatpush1.bf16.msra.mxu0 0
      %1207 = vmatprep.subr.bf16.mxu0 0
      %1208 = vmatpush1.bf16.msra.mxu0 0
      %1209 = vmatprep.subr.bf16.mxu0 0
      %1210 = vmatpush1.bf16.msra.mxu0 0
      %1211 = vmatprep.subr.bf16.mxu0 0
      %1212 = vmatpush1.bf16.msra.mxu0 0
      %1213 = vmatprep.subr.bf16.mxu0 0
      %1214 = vmatpush1.bf16.msra.mxu0 0
      %1215 = vmatprep.subr.bf16.mxu0 0
      %1216 = vmatpush1.bf16.msra.mxu0 0
      %1217 = vmatprep.subr.bf16.mxu0 0
      %1218 = vmatpush1.bf16.msra.mxu0 0
      %1219 = vmatprep.subr.bf16.mxu0 0
      %1220 = vmatpush1.bf16.msra.mxu0 0
      %1221 = vmatprep.subr.bf16.mxu0 0
      %1222 = vmatpush1.bf16.msra.mxu0 0
      %1223 = vmatprep.subr.bf16.mxu0 0
      %1224 = vmatpush1.bf16.msra.mxu0 0
      %1225 = vmatprep.subr.bf16.mxu0 0
      %1226 = vmatpush1.bf16.msra.mxu0 0
      %1227 = vmatprep.mubr.bf16.mxu0 0
      %1228 = vmatmul.mubr.bf16.gmra.mrb[0].mxu0 %v1172
      %v1229 = vpop.f32.mrb[0].mxu0
      %v1230 = vadd.f32 0.0, %v1229
      %v1231 = vpop.f32.mrb[0].mxu0
      %v1232 = vadd.f32 0.0, %v1231
      %v1233 = vpop.f32.mrb[0].mxu0
      %v1234 = vadd.f32 0.0, %v1233
      %v1235 = vpop.f32.mrb[0].mxu0
      %v1236 = vadd.f32 0.0, %v1235
      %1237 = vmatprep.mubr.bf16.mxu0 0
      %1238 = vmatmul.mubr.bf16.gmra.mrb[0].mxu0 %v1175
      %v1239 = vpop.f32.mrb[0].mxu0
      %v1240 = vadd.f32 0.0, %v1239
      %v1241 = vpop.f32.mrb[0].mxu0
      %v1242 = vadd.f32 0.0, %v1241
      %v1243 = vpop.f32.mrb[0].mxu0
      %v1244 = vadd.f32 0.0, %v1243
      %v1245 = vpop.f32.mrb[0].mxu0
      %v1246 = vadd.f32 0.0, %v1245
      %1247 = vmatprep.mubr.bf16.mxu0 0
      %1248 = vmatmul.mubr.bf16.gmra.mrb[0].mxu0 %v1178
      %v1249 = vpop.f32.mrb[0].mxu0
      %v1250 = vadd.f32 0.0, %v1249
      %v1251 = vpop.f32.mrb[0].mxu0
      %v1252 = vadd.f32 0.0, %v1251
      %v1253 = vpop.f32.mrb[0].mxu0
      %v1254 = vadd.f32 0.0, %v1253
      %v1255 = vpop.f32.mrb[0].mxu0
      %v1256 = vadd.f32 0.0, %v1255
      %1257 = vmatprep.mubr.bf16.mxu0 0
      %1258 = vmatmul.mubr.bf16.gmra.mrb[0].mxu0 %v1181
      %v1259 = vpop.f32.mrb[0].mxu0
      %v1260 = vadd.f32 0.0, %v1259
      %v1261 = vpop.f32.mrb[0].mxu0
      %v1262 = vadd.f32 0.0, %v1261
      %v1263 = vpop.f32.mrb[0].mxu0
      %v1264 = vadd.f32 0.0, %v1263
      %v1265 = vpop.f32.mrb[0].mxu0
      %v1266 = vadd.f32 0.0, %v1265
      %1267 = vmatprep.mubr.bf16.mxu0 0
      %1268 = vmatmul.mubr.bf16.gmra.mrb[0].mxu0 %v1184
      %v1269 = vpop.f32.mrb[0].mxu0
      %v1270 = vadd.f32 0.0, %v1269
      %v1271 = vpop.f32.mrb[0].mxu0
      %v1272 = vadd.f32 0.0, %v1271
      %v1273 = vpop.f32.mrb[0].mxu0
      %v1274 = vadd.f32 0.0, %v1273
      %v1275 = vpop.f32.mrb[0].mxu0
      %v1276 = vadd.f32 0.0, %v1275
      %1277 = vmatprep.mubr.bf16.mxu0 0
      %1278 = vmatmul.mubr.bf16.gmra.mrb[0].mxu0 %v1187
      %v1279 = vpop.f32.mrb[0].mxu0
      %v1280 = vadd.f32 0.0, %v1279
      %v1281 = vpop.f32.mrb[0].mxu0
      %v1282 = vadd.f32 0.0, %v1281
      %v1283 = vpop.f32.mrb[0].mxu0
      %v1284 = vadd.f32 0.0, %v1283
      %v1285 = vpop.f32.mrb[0].mxu0
      %v1286 = vadd.f32 0.0, %v1285
      %1287 = vmatprep.mubr.bf16.mxu0 0
      %1288 = vmatmul.mubr.bf16.gmra.mrb[0].mxu0 %v1190
      %v1289 = vpop.f32.mrb[0].mxu0
      %v1290 = vadd.f32 0.0, %v1289
      %v1291 = vpop.f32.mrb[0].mxu0
      %v1292 = vadd.f32 0.0, %v1291
      %v1293 = vpop.f32.mrb[0].mxu0
      %v1294 = vadd.f32 0.0, %v1293
      %v1295 = vpop.f32.mrb[0].mxu0
      %v1296 = vadd.f32 0.0, %v1295
      %1297 = vmatprep.mubr.bf16.mxu0 0
      %1298 = vmatmul.mubr.bf16.gmra.mrb[0].mxu0 %v1193
      %v1299 = vpop.f32.mrb[0].mxu0
      %v1300 = vadd.f32 0.0, %v1299
      %v1301 = vpop.f32.mrb[0].mxu0
      %v1302 = vadd.f32 0.0, %v1301
      %v1303 = vpop.f32.mrb[0].mxu0
      %v1304 = vadd.f32 0.0, %v1303
      %v1305 = vpop.f32.mrb[0].mxu0
      %v1306 = vadd.f32 0.0, %v1305
      %1307 = vdwg.mxu0
      %v1308 = vadd.f32 %v1025, %v1230
      %v1309 = vadd.f32 %v1027, %v1232
      %v1310 = vadd.f32 %v1029, %v1234
      %v1311 = vadd.f32 %v1031, %v1236
      %v1312 = vadd.f32 %v1035, %v1240
      %v1313 = vadd.f32 %v1037, %v1242
      %v1314 = vadd.f32 %v1039, %v1244
      %v1315 = vadd.f32 %v1041, %v1246
      %v1316 = vadd.f32 %v1045, %v1250
      %v1317 = vadd.f32 %v1047, %v1252
      %v1318 = vadd.f32 %v1049, %v1254
      %v1319 = vadd.f32 %v1051, %v1256
      %v1320 = vadd.f32 %v1055, %v1260
      %v1321 = vadd.f32 %v1057, %v1262
      %v1322 = vadd.f32 %v1059, %v1264
      %v1323 = vadd.f32 %v1061, %v1266
      %v1324 = vadd.f32 %v1065, %v1270
      %v1325 = vadd.f32 %v1067, %v1272
      %v1326 = vadd.f32 %v1069, %v1274
      %v1327 = vadd.f32 %v1071, %v1276
      %v1328 = vadd.f32 %v1075, %v1280
      %v1329 = vadd.f32 %v1077, %v1282
      %v1330 = vadd.f32 %v1079, %v1284
      %v1331 = vadd.f32 %v1081, %v1286
      %v1332 = vadd.f32 %v1085, %v1290
      %v1333 = vadd.f32 %v1087, %v1292
      %v1334 = vadd.f32 %v1089, %v1294
      %v1335 = vadd.f32 %v1091, %v1296
      %v1336 = vadd.f32 %v1095, %v1300
      %v1337 = vadd.f32 %v1097, %v1302
      %v1338 = vadd.f32 %v1099, %v1304
      %v1339 = vadd.f32 %v1101, %v1306
      %v1340 = vld [vmem:[%s8] sm:$0xf]
      %v1341 = vld [vmem:[%s8 + $0x4] sm:$0xf]
      %v1342 = vld [vmem:[%s8 + $0x8] sm:$0xf]
      %v1343 = vld [vmem:[%s8 + $0xc] sm:$0xf]
      %v1344 = vld [vmem:[%s8 + $0x10] sm:$0xf]
      %v1345 = vld [vmem:[%s8 + $0x14] sm:$0xf]
      %v1346 = vld [vmem:[%s8 + $0x18] sm:$0xf]
      %v1347 = vld [vmem:[%s8 + $0x1c] sm:$0xf]
      %v1348 = vld [vmem:[%s8 + $0x20] sm:$0xf]
      %v1349 = vld [vmem:[%s8 + $0x24] sm:$0xf]
      %v1350 = vld [vmem:[%s8 + $0x28] sm:$0xf]
      %v1351 = vld [vmem:[%s8 + $0x2c] sm:$0xf]
      %v1352 = vld [vmem:[%s8 + $0x30] sm:$0xf]
      %v1353 = vld [vmem:[%s8 + $0x34] sm:$0xf]
      %v1354 = vld [vmem:[%s8 + $0x38] sm:$0xf]
      %v1355 = vld [vmem:[%s8 + $0x3c] sm:$0xf]
      %v1356 = vld [vmem:[%s656] sm:$0xf]
      %v1373 = vunpack.c.l.b16 %v1340
      %v1374 = vunpack.c.l.b16 %v1341
      %v1375 = vunpack.c.l.b16 %v1342
      %v1376 = vunpack.c.l.b16 %v1343
      %v1377 = vunpack.c.l.b16 %v1344
      %v1378 = vunpack.c.l.b16 %v1345
      %v1379 = vunpack.c.l.b16 %v1346
      %v1380 = vunpack.c.l.b16 %v1347
      %v1381 = vunpack.c.l.b16 %v1348
      %v1382 = vunpack.c.l.b16 %v1349
      %v1383 = vunpack.c.l.b16 %v1350
      %v1384 = vunpack.c.l.b16 %v1351
      %v1385 = vunpack.c.l.b16 %v1352
      %v1386 = vunpack.c.l.b16 %v1353
      %v1387 = vunpack.c.l.b16 %v1354
      %v1388 = vunpack.c.l.b16 %v1355
      %v1389 = vpack.c.b16 %v1374, %v1373
      %v1390 = vpack.c.b16 %v1376, %v1375
      %v1391 = vpack.c.b16 %v1378, %v1377
      %v1392 = vpack.c.b16 %v1380, %v1379
      %v1393 = vpack.c.b16 %v1382, %v1381
      %v1394 = vpack.c.b16 %v1384, %v1383
      %v1395 = vpack.c.b16 %v1386, %v1385
      %v1396 = vpack.c.b16 %v1388, %v1387
      %v1399 = vunpack.c.l.s4 1983009808
      %v1400 = vunpack.c.0.s8 %v1399
      %v1401 = vlaneseq
      %v1402 = vshrl.u32 %v1401, 7
      %v1403 = vsub.s32 %v1400, %v1402
      %v1404 = vrot.slane %v1356, %v1403
      %v1405 = vcombine.high %v1404, %v1404
      %vm1406 = vcmask 23552
      %v1408 = vsel %vm1406, %v1389, 0
      %v1411 = vsel %vm1406, %v1390, 0
      %v1414 = vsel %vm1406, %v1391, 0
      %v1417 = vsel %vm1406, %v1392, 0
      %v1420 = vsel %vm1406, %v1393, 0
      %v1423 = vsel %vm1406, %v1394, 0
      %v1426 = vsel %vm1406, %v1395, 0
      %v1429 = vsel %vm1406, %v1396, 0
      %vm1431 = vcmask 1040384
      %vm1432 = vcmask 1041408
      %v1433 = vsel %vm1431, 4294967295, 65535
      %v1434 = vsel %vm1432, %v1433, 0
      %v1436 = vand.u32 %v1404, %v1434
      %v1439 = vand.u32 %v1405, %v1434
      %1441 = vmatprep.subr.bf16.mxu0 %v1439
      %1442 = vmatpush1.bf16.msra.mxu0 %v1436
      %1443 = vmatprep.subr.bf16.mxu0 0
      %1444 = vmatpush1.bf16.msra.mxu0 0
      %1445 = vmatprep.subr.bf16.mxu0 0
      %1446 = vmatpush1.bf16.msra.mxu0 0
      %1447 = vmatprep.subr.bf16.mxu0 0
      %1448 = vmatpush1.bf16.msra.mxu0 0
      %1449 = vmatprep.subr.bf16.mxu0 0
      %1450 = vmatpush1.bf16.msra.mxu0 0
      %1451 = vmatprep.subr.bf16.mxu0 0
      %1452 = vmatpush1.bf16.msra.mxu0 0
      %1453 = vmatprep.subr.bf16.mxu0 0
      %1454 = vmatpush1.bf16.msra.mxu0 0
      %1455 = vmatprep.subr.bf16.mxu0 0
      %1456 = vmatpush1.bf16.msra.mxu0 0
      %1457 = vmatprep.subr.bf16.mxu0 0
      %1458 = vmatpush1.bf16.msra.mxu0 0
      %1459 = vmatprep.subr.bf16.mxu0 0
      %1460 = vmatpush1.bf16.msra.mxu0 0
      %1461 = vmatprep.subr.bf16.mxu0 0
      %1462 = vmatpush1.bf16.msra.mxu0 0
      %1463 = vmatprep.subr.bf16.mxu0 0
      %1464 = vmatpush1.bf16.msra.mxu0 0
      %1465 = vmatprep.subr.bf16.mxu0 0
      %1466 = vmatpush1.bf16.msra.mxu0 0
      %1467 = vmatprep.subr.bf16.mxu0 0
      %1468 = vmatpush1.bf16.msra.mxu0 0
      %1469 = vmatprep.subr.bf16.mxu0 0
      %1470 = vmatpush1.bf16.msra.mxu0 0
      %1471 = vmatprep.subr.bf16.mxu0 0
      %1472 = vmatpush1.bf16.msra.mxu0 0
      %1473 = vmatprep.mubr.bf16.mxu0 0
      %1474 = vmatmul.mubr.bf16.gmra.mrb[0].mxu0 %v1408
      %v1475 = vpop.f32.mrb[0].mxu0
      %v1476 = vadd.f32 0.0, %v1475
      %v1477 = vpop.f32.mrb[0].mxu0
      %v1478 = vadd.f32 0.0, %v1477
      %v1479 = vpop.f32.mrb[0].mxu0
      %v1480 = vadd.f32 0.0, %v1479
      %v1481 = vpop.f32.mrb[0].mxu0
      %v1482 = vadd.f32 0.0, %v1481
      %1483 = vmatprep.mubr.bf16.mxu0 0
      %1484 = vmatmul.mubr.bf16.gmra.mrb[0].mxu0 %v1411
      %v1485 = vpop.f32.mrb[0].mxu0
      %v1486 = vadd.f32 0.0, %v1485
      %v1487 = vpop.f32.mrb[0].mxu0
      %v1488 = vadd.f32 0.0, %v1487
      %v1489 = vpop.f32.mrb[0].mxu0
      %v1490 = vadd.f32 0.0, %v1489
      %v1491 = vpop.f32.mrb[0].mxu0
      %v1492 = vadd.f32 0.0, %v1491
      %1493 = vmatprep.mubr.bf16.mxu0 0
      %1494 = vmatmul.mubr.bf16.gmra.mrb[0].mxu0 %v1414
      %v1495 = vpop.f32.mrb[0].mxu0
      %v1496 = vadd.f32 0.0, %v1495
      %v1497 = vpop.f32.mrb[0].mxu0
      %v1498 = vadd.f32 0.0, %v1497
      %v1499 = vpop.f32.mrb[0].mxu0
      %v1500 = vadd.f32 0.0, %v1499
      %v1501 = vpop.f32.mrb[0].mxu0
      %v1502 = vadd.f32 0.0, %v1501
      %1503 = vmatprep.mubr.bf16.mxu0 0
      %1504 = vmatmul.mubr.bf16.gmra.mrb[0].mxu0 %v1417
      %v1505 = vpop.f32.mrb[0].mxu0
      %v1506 = vadd.f32 0.0, %v1505
      %v1507 = vpop.f32.mrb[0].mxu0
      %v1508 = vadd.f32 0.0, %v1507
      %v1509 = vpop.f32.mrb[0].mxu0
      %v1510 = vadd.f32 0.0, %v1509
      %v1511 = vpop.f32.mrb[0].mxu0
      %v1512 = vadd.f32 0.0, %v1511
      %1513 = vmatprep.mubr.bf16.mxu0 0
      %1514 = vmatmul.mubr.bf16.gmra.mrb[0].mxu0 %v1420
      %v1515 = vpop.f32.mrb[0].mxu0
      %v1516 = vadd.f32 0.0, %v1515
      %v1517 = vpop.f32.mrb[0].mxu0
      %v1518 = vadd.f32 0.0, %v1517
      %v1519 = vpop.f32.mrb[0].mxu0
      %v1520 = vadd.f32 0.0, %v1519
      %v1521 = vpop.f32.mrb[0].mxu0
      %v1522 = vadd.f32 0.0, %v1521
      %1523 = vmatprep.mubr.bf16.mxu0 0
      %1524 = vmatmul.mubr.bf16.gmra.mrb[0].mxu0 %v1423
      %v1525 = vpop.f32.mrb[0].mxu0
      %v1526 = vadd.f32 0.0, %v1525
      %v1527 = vpop.f32.mrb[0].mxu0
      %v1528 = vadd.f32 0.0, %v1527
      %v1529 = vpop.f32.mrb[0].mxu0
      %v1530 = vadd.f32 0.0, %v1529
      %v1531 = vpop.f32.mrb[0].mxu0
      %v1532 = vadd.f32 0.0, %v1531
      %1533 = vmatprep.mubr.bf16.mxu0 0
      %1534 = vmatmul.mubr.bf16.gmra.mrb[0].mxu0 %v1426
      %v1535 = vpop.f32.mrb[0].mxu0
      %v1536 = vadd.f32 0.0, %v1535
      %v1537 = vpop.f32.mrb[0].mxu0
      %v1538 = vadd.f32 0.0, %v1537
      %v1539 = vpop.f32.mrb[0].mxu0
      %v1540 = vadd.f32 0.0, %v1539
      %v1541 = vpop.f32.mrb[0].mxu0
      %v1542 = vadd.f32 0.0, %v1541
      %1543 = vmatprep.mubr.bf16.mxu0 0
      %1544 = vmatmul.mubr.bf16.gmra.mrb[0].mxu0 %v1429
      %v1545 = vpop.f32.mrb[0].mxu0
      %v1546 = vadd.f32 0.0, %v1545
      %v1547 = vpop.f32.mrb[0].mxu0
      %v1548 = vadd.f32 0.0, %v1547
      %v1549 = vpop.f32.mrb[0].mxu0
      %v1550 = vadd.f32 0.0, %v1549
      %v1551 = vpop.f32.mrb[0].mxu0
      %v1552 = vadd.f32 0.0, %v1551
      %1553 = vdwg.mxu0
      %v1554 = vadd.f32 %v1308, %v1476
      %v1555 = vadd.f32 %v1309, %v1478
      %v1556 = vadd.f32 %v1310, %v1480
      %v1557 = vadd.f32 %v1311, %v1482
      %v1558 = vadd.f32 %v1312, %v1486
      %v1559 = vadd.f32 %v1313, %v1488
      %v1560 = vadd.f32 %v1314, %v1490
      %v1561 = vadd.f32 %v1315, %v1492
      %v1562 = vadd.f32 %v1316, %v1496
      %v1563 = vadd.f32 %v1317, %v1498
      %v1564 = vadd.f32 %v1318, %v1500
      %v1565 = vadd.f32 %v1319, %v1502
      %v1566 = vadd.f32 %v1320, %v1506
      %v1567 = vadd.f32 %v1321, %v1508
      %v1568 = vadd.f32 %v1322, %v1510
      %v1569 = vadd.f32 %v1323, %v1512
      %v1570 = vadd.f32 %v1324, %v1516
      %v1571 = vadd.f32 %v1325, %v1518
      %v1572 = vadd.f32 %v1326, %v1520
      %v1573 = vadd.f32 %v1327, %v1522
      %v1574 = vadd.f32 %v1328, %v1526
      %v1575 = vadd.f32 %v1329, %v1528
      %v1576 = vadd.f32 %v1330, %v1530
      %v1577 = vadd.f32 %v1331, %v1532
      %v1578 = vadd.f32 %v1332, %v1536
      %v1579 = vadd.f32 %v1333, %v1538
      %v1580 = vadd.f32 %v1334, %v1540
      %v1581 = vadd.f32 %v1335, %v1542
      %v1582 = vadd.f32 %v1336, %v1546
      %v1583 = vadd.f32 %v1337, %v1548
      %v1584 = vadd.f32 %v1338, %v1550
      %v1585 = vadd.f32 %v1339, %v1552
      %v1586 = vld [vmem:[%s9] sm:$0xf]
      %v1587 = vld [vmem:[%s9 + $0x4] sm:$0xf]
      %v1588 = vld [vmem:[%s9 + $0x8] sm:$0xf]
      %v1589 = vld [vmem:[%s9 + $0xc] sm:$0xf]
      %v1590 = vld [vmem:[%s9 + $0x10] sm:$0xf]
      %v1591 = vld [vmem:[%s9 + $0x14] sm:$0xf]
      %v1592 = vld [vmem:[%s9 + $0x18] sm:$0xf]
      %v1593 = vld [vmem:[%s9 + $0x1c] sm:$0xf]
      %v1594 = vld [vmem:[%s9 + $0x20] sm:$0xf]
      %v1595 = vld [vmem:[%s9 + $0x24] sm:$0xf]
      %v1596 = vld [vmem:[%s9 + $0x28] sm:$0xf]
      %v1597 = vld [vmem:[%s9 + $0x2c] sm:$0xf]
      %v1598 = vld [vmem:[%s9 + $0x30] sm:$0xf]
      %v1599 = vld [vmem:[%s9 + $0x34] sm:$0xf]
      %v1600 = vld [vmem:[%s9 + $0x38] sm:$0xf]
      %v1601 = vld [vmem:[%s9 + $0x3c] sm:$0xf]
      %v1602 = vld [vmem:[%s666] sm:$0xf]
      %v1619 = vunpack.c.l.b16 %v1586
      %v1620 = vunpack.c.l.b16 %v1587
      %v1621 = vunpack.c.l.b16 %v1588
      %v1622 = vunpack.c.l.b16 %v1589
      %v1623 = vunpack.c.l.b16 %v1590
      %v1624 = vunpack.c.l.b16 %v1591
      %v1625 = vunpack.c.l.b16 %v1592
      %v1626 = vunpack.c.l.b16 %v1593
      %v1627 = vunpack.c.l.b16 %v1594
      %v1628 = vunpack.c.l.b16 %v1595
      %v1629 = vunpack.c.l.b16 %v1596
      %v1630 = vunpack.c.l.b16 %v1597
      %v1631 = vunpack.c.l.b16 %v1598
      %v1632 = vunpack.c.l.b16 %v1599
      %v1633 = vunpack.c.l.b16 %v1600
      %v1634 = vunpack.c.l.b16 %v1601
      %v1635 = vpack.c.b16 %v1620, %v1619
      %v1636 = vpack.c.b16 %v1622, %v1621
      %v1637 = vpack.c.b16 %v1624, %v1623
      %v1638 = vpack.c.b16 %v1626, %v1625
      %v1639 = vpack.c.b16 %v1628, %v1627
      %v1640 = vpack.c.b16 %v1630, %v1629
      %v1641 = vpack.c.b16 %v1632, %v1631
      %v1642 = vpack.c.b16 %v1634, %v1633
      %v1645 = vunpack.c.l.s4 1983009808
      %v1646 = vunpack.c.0.s8 %v1645
      %v1647 = vlaneseq
      %v1648 = vshrl.u32 %v1647, 7
      %v1649 = vsub.s32 %v1646, %v1648
      %v1650 = vrot.slane %v1602, %v1649
      %v1651 = vcombine.high %v1650, %v1650
      %v1653 = vsel %vm1406, %v1635, 0
      %v1656 = vsel %vm1406, %v1636, 0
      %v1659 = vsel %vm1406, %v1637, 0
      %v1662 = vsel %vm1406, %v1638, 0
      %v1665 = vsel %vm1406, %v1639, 0
      %v1668 = vsel %vm1406, %v1640, 0
      %v1671 = vsel %vm1406, %v1641, 0
      %v1674 = vsel %vm1406, %v1642, 0
      %v1677 = vand.u32 %v1650, %v1434
      %v1680 = vand.u32 %v1651, %v1434
      %1682 = vmatprep.subr.bf16.mxu0 %v1680
      %1683 = vmatpush1.bf16.msra.mxu0 %v1677
      %1684 = vmatprep.subr.bf16.mxu0 0
      %1685 = vmatpush1.bf16.msra.mxu0 0
      %1686 = vmatprep.subr.bf16.mxu0 0
      %1687 = vmatpush1.bf16.msra.mxu0 0
      %1688 = vmatprep.subr.bf16.mxu0 0
      %1689 = vmatpush1.bf16.msra.mxu0 0
      %1690 = vmatprep.subr.bf16.mxu0 0
      %1691 = vmatpush1.bf16.msra.mxu0 0
      %1692 = vmatprep.subr.bf16.mxu0 0
      %1693 = vmatpush1.bf16.msra.mxu0 0
      %1694 = vmatprep.subr.bf16.mxu0 0
      %1695 = vmatpush1.bf16.msra.mxu0 0
      %1696 = vmatprep.subr.bf16.mxu0 0
      %1697 = vmatpush1.bf16.msra.mxu0 0
      %1698 = vmatprep.subr.bf16.mxu0 0
      %1699 = vmatpush1.bf16.msra.mxu0 0
      %1700 = vmatprep.subr.bf16.mxu0 0
      %1701 = vmatpush1.bf16.msra.mxu0 0
      %1702 = vmatprep.subr.bf16.mxu0 0
      %1703 = vmatpush1.bf16.msra.mxu0 0
      %1704 = vmatprep.subr.bf16.mxu0 0
      %1705 = vmatpush1.bf16.msra.mxu0 0
      %1706 = vmatprep.subr.bf16.mxu0 0
      %1707 = vmatpush1.bf16.msra.mxu0 0
      %1708 = vmatprep.subr.bf16.mxu0 0
      %1709 = vmatpush1.bf16.msra.mxu0 0
      %1710 = vmatprep.subr.bf16.mxu0 0
      %1711 = vmatpush1.bf16.msra.mxu0 0
      %1712 = vmatprep.subr.bf16.mxu0 0
      %1713 = vmatpush1.bf16.msra.mxu0 0
      %1714 = vmatprep.mubr.bf16.mxu0 0
      %1715 = vmatmul.mubr.bf16.gmra.mrb[0].mxu0 %v1653
      %v1716 = vpop.f32.mrb[0].mxu0
      %v1717 = vadd.f32 0.0, %v1716
      %v1718 = vpop.f32.mrb[0].mxu0
      %v1719 = vadd.f32 0.0, %v1718
      %v1720 = vpop.f32.mrb[0].mxu0
      %v1721 = vadd.f32 0.0, %v1720
      %v1722 = vpop.f32.mrb[0].mxu0
      %v1723 = vadd.f32 0.0, %v1722
      %1724 = vmatprep.mubr.bf16.mxu0 0
      %1725 = vmatmul.mubr.bf16.gmra.mrb[0].mxu0 %v1656
      %v1726 = vpop.f32.mrb[0].mxu0
      %v1727 = vadd.f32 0.0, %v1726
      %v1728 = vpop.f32.mrb[0].mxu0
      %v1729 = vadd.f32 0.0, %v1728
      %v1730 = vpop.f32.mrb[0].mxu0
      %v1731 = vadd.f32 0.0, %v1730
      %v1732 = vpop.f32.mrb[0].mxu0
      %v1733 = vadd.f32 0.0, %v1732
      %1734 = vmatprep.mubr.bf16.mxu0 0
      %1735 = vmatmul.mubr.bf16.gmra.mrb[0].mxu0 %v1659
      %v1736 = vpop.f32.mrb[0].mxu0
      %v1737 = vadd.f32 0.0, %v1736
      %v1738 = vpop.f32.mrb[0].mxu0
      %v1739 = vadd.f32 0.0, %v1738
      %v1740 = vpop.f32.mrb[0].mxu0
      %v1741 = vadd.f32 0.0, %v1740
      %v1742 = vpop.f32.mrb[0].mxu0
      %v1743 = vadd.f32 0.0, %v1742
      %1744 = vmatprep.mubr.bf16.mxu0 0
      %1745 = vmatmul.mubr.bf16.gmra.mrb[0].mxu0 %v1662
      %v1746 = vpop.f32.mrb[0].mxu0
      %v1747 = vadd.f32 0.0, %v1746
      %v1748 = vpop.f32.mrb[0].mxu0
      %v1749 = vadd.f32 0.0, %v1748
      %v1750 = vpop.f32.mrb[0].mxu0
      %v1751 = vadd.f32 0.0, %v1750
      %v1752 = vpop.f32.mrb[0].mxu0
      %v1753 = vadd.f32 0.0, %v1752
      %1754 = vmatprep.mubr.bf16.mxu0 0
      %1755 = vmatmul.mubr.bf16.gmra.mrb[0].mxu0 %v1665
      %v1756 = vpop.f32.mrb[0].mxu0
      %v1757 = vadd.f32 0.0, %v1756
      %v1758 = vpop.f32.mrb[0].mxu0
      %v1759 = vadd.f32 0.0, %v1758
      %v1760 = vpop.f32.mrb[0].mxu0
      %v1761 = vadd.f32 0.0, %v1760
      %v1762 = vpop.f32.mrb[0].mxu0
      %v1763 = vadd.f32 0.0, %v1762
      %1764 = vmatprep.mubr.bf16.mxu0 0
      %1765 = vmatmul.mubr.bf16.gmra.mrb[0].mxu0 %v1668
      %v1766 = vpop.f32.mrb[0].mxu0
      %v1767 = vadd.f32 0.0, %v1766
      %v1768 = vpop.f32.mrb[0].mxu0
      %v1769 = vadd.f32 0.0, %v1768
      %v1770 = vpop.f32.mrb[0].mxu0
      %v1771 = vadd.f32 0.0, %v1770
      %v1772 = vpop.f32.mrb[0].mxu0
      %v1773 = vadd.f32 0.0, %v1772
      %1774 = vmatprep.mubr.bf16.mxu0 0
      %1775 = vmatmul.mubr.bf16.gmra.mrb[0].mxu0 %v1671
      %v1776 = vpop.f32.mrb[0].mxu0
      %v1777 = vadd.f32 0.0, %v1776
      %v1778 = vpop.f32.mrb[0].mxu0
      %v1779 = vadd.f32 0.0, %v1778
      %v1780 = vpop.f32.mrb[0].mxu0
      %v1781 = vadd.f32 0.0, %v1780
      %v1782 = vpop.f32.mrb[0].mxu0
      %v1783 = vadd.f32 0.0, %v1782
      %1784 = vmatprep.mubr.bf16.mxu0 0
      %1785 = vmatmul.mubr.bf16.gmra.mrb[0].mxu0 %v1674
      %v1786 = vpop.f32.mrb[0].mxu0
      %v1787 = vadd.f32 0.0, %v1786
      %v1788 = vpop.f32.mrb[0].mxu0
      %v1789 = vadd.f32 0.0, %v1788
      %v1790 = vpop.f32.mrb[0].mxu0
      %v1791 = vadd.f32 0.0, %v1790
      %v1792 = vpop.f32.mrb[0].mxu0
      %v1793 = vadd.f32 0.0, %v1792
      %1794 = vdwg.mxu0
      %v1795 = vadd.f32 %v1554, %v1717
      %v1796 = vadd.f32 %v1555, %v1719
      %v1797 = vadd.f32 %v1556, %v1721
      %v1798 = vadd.f32 %v1557, %v1723
      %v1799 = vadd.f32 %v1558, %v1727
      %v1800 = vadd.f32 %v1559, %v1729
      %v1801 = vadd.f32 %v1560, %v1731
      %v1802 = vadd.f32 %v1561, %v1733
      %v1803 = vadd.f32 %v1562, %v1737
      %v1804 = vadd.f32 %v1563, %v1739
      %v1805 = vadd.f32 %v1564, %v1741
      %v1806 = vadd.f32 %v1565, %v1743
      %v1807 = vadd.f32 %v1566, %v1747
      %v1808 = vadd.f32 %v1567, %v1749
      %v1809 = vadd.f32 %v1568, %v1751
      %v1810 = vadd.f32 %v1569, %v1753
      %v1811 = vadd.f32 %v1570, %v1757
      %v1812 = vadd.f32 %v1571, %v1759
      %v1813 = vadd.f32 %v1572, %v1761
      %v1814 = vadd.f32 %v1573, %v1763
      %v1815 = vadd.f32 %v1574, %v1767
      %v1816 = vadd.f32 %v1575, %v1769
      %v1817 = vadd.f32 %v1576, %v1771
      %v1818 = vadd.f32 %v1577, %v1773
      %v1819 = vadd.f32 %v1578, %v1777
      %v1820 = vadd.f32 %v1579, %v1779
      %v1821 = vadd.f32 %v1580, %v1781
      %v1822 = vadd.f32 %v1581, %v1783
      %v1823 = vadd.f32 %v1582, %v1787
      %v1824 = vadd.f32 %v1583, %v1789
      %v1825 = vadd.f32 %v1584, %v1791
      %v1826 = vadd.f32 %v1585, %v1793
      %v1827 = vld [vmem:[%s10] sm:$0xff]
      %v1828 = vld [vmem:[%s10 + $0x8] sm:$0xff]
      %v1829 = vld [vmem:[%s10 + $0x10] sm:$0xff]
      %v1830 = vld [vmem:[%s10 + $0x18] sm:$0xff]
      %v1831 = vld [vmem:[%s10 + $0x20] sm:$0xff]
      %v1832 = vld [vmem:[%s10 + $0x28] sm:$0xff]
      %v1833 = vld [vmem:[%s10 + $0x30] sm:$0xff]
      %v1834 = vld [vmem:[%s10 + $0x38] sm:$0xff]
      %v1835 = vld [vmem:[%s10 + $0x40] sm:$0xff]
      %v1836 = vld [vmem:[%s10 + $0x48] sm:$0xff]
      %v1837 = vld [vmem:[%s10 + $0x50] sm:$0xff]
      %v1838 = vld [vmem:[%s10 + $0x58] sm:$0xff]
      %v1839 = vld [vmem:[%s10 + $0x60] sm:$0xff]
      %v1840 = vld [vmem:[%s10 + $0x68] sm:$0xff]
      %v1841 = vld [vmem:[%s10 + $0x70] sm:$0xff]
      %v1842 = vld [vmem:[%s10 + $0x78] sm:$0xff]
      %1844 = vset.pattern.permute.xlu0 0
      %1845 = vperm.xlu0 %1844, %v1827
      %v1846 = vpop.permute.xlu0 %1845
      %1849 = vset.pattern.permute.xlu0 0
      %1850 = vperm.xlu0 %1849, %v1828
      %v1851 = vpop.permute.xlu0 %1850
      %1854 = vset.pattern.permute.xlu0 0
      %1855 = vperm.xlu0 %1854, %v1829
      %v1856 = vpop.permute.xlu0 %1855
      %1859 = vset.pattern.permute.xlu0 0
      %1860 = vperm.xlu0 %1859, %v1830
      %v1861 = vpop.permute.xlu0 %1860
      %1864 = vset.pattern.permute.xlu0 0
      %1865 = vperm.xlu0 %1864, %v1831
      %v1866 = vpop.permute.xlu0 %1865
      %1869 = vset.pattern.permute.xlu0 0
      %1870 = vperm.xlu0 %1869, %v1832
      %v1871 = vpop.permute.xlu0 %1870
      %1874 = vset.pattern.permute.xlu0 0
      %1875 = vperm.xlu0 %1874, %v1833
      %v1876 = vpop.permute.xlu0 %1875
      %1879 = vset.pattern.permute.xlu0 0
      %1880 = vperm.xlu0 %1879, %v1834
      %v1881 = vpop.permute.xlu0 %1880
      %1884 = vset.pattern.permute.xlu0 0
      %1885 = vperm.xlu0 %1884, %v1835
      %v1886 = vpop.permute.xlu0 %1885
      %1889 = vset.pattern.permute.xlu0 0
      %1890 = vperm.xlu0 %1889, %v1836
      %v1891 = vpop.permute.xlu0 %1890
      %1894 = vset.pattern.permute.xlu0 0
      %1895 = vperm.xlu0 %1894, %v1837
      %v1896 = vpop.permute.xlu0 %1895
      %1899 = vset.pattern.permute.xlu0 0
      %1900 = vperm.xlu0 %1899, %v1838
      %v1901 = vpop.permute.xlu0 %1900
      %1904 = vset.pattern.permute.xlu0 0
      %1905 = vperm.xlu0 %1904, %v1839
      %v1906 = vpop.permute.xlu0 %1905
      %1909 = vset.pattern.permute.xlu0 0
      %1910 = vperm.xlu0 %1909, %v1840
      %v1911 = vpop.permute.xlu0 %1910
      %1914 = vset.pattern.permute.xlu0 0
      %1915 = vperm.xlu0 %1914, %v1841
      %v1916 = vpop.permute.xlu0 %1915
      %1919 = vset.pattern.permute.xlu0 0
      %1920 = vperm.xlu0 %1919, %v1842
      %v1921 = vpop.permute.xlu0 %1920
      %v1923 = vadd.f32 %v1795, %v1846
      %v1924 = vadd.f32 %v1796, %v1846
      %v1925 = vadd.f32 %v1797, %v1851
      %v1926 = vadd.f32 %v1798, %v1851
      %v1927 = vadd.f32 %v1799, %v1856
      %v1928 = vadd.f32 %v1800, %v1856
      %v1929 = vadd.f32 %v1801, %v1861
      %v1930 = vadd.f32 %v1802, %v1861
      %v1931 = vadd.f32 %v1803, %v1866
      %v1932 = vadd.f32 %v1804, %v1866
      %v1933 = vadd.f32 %v1805, %v1871
      %v1934 = vadd.f32 %v1806, %v1871
      %v1935 = vadd.f32 %v1807, %v1876
      %v1936 = vadd.f32 %v1808, %v1876
      %v1937 = vadd.f32 %v1809, %v1881
      %v1938 = vadd.f32 %v1810, %v1881
      %v1939 = vadd.f32 %v1811, %v1886
      %v1940 = vadd.f32 %v1812, %v1886
      %v1941 = vadd.f32 %v1813, %v1891
      %v1942 = vadd.f32 %v1814, %v1891
      %v1943 = vadd.f32 %v1815, %v1896
      %v1944 = vadd.f32 %v1816, %v1896
      %v1945 = vadd.f32 %v1817, %v1901
      %v1946 = vadd.f32 %v1818, %v1901
      %v1947 = vadd.f32 %v1819, %v1906
      %v1948 = vadd.f32 %v1820, %v1906
      %v1949 = vadd.f32 %v1821, %v1911
      %v1950 = vadd.f32 %v1822, %v1911
      %v1951 = vadd.f32 %v1823, %v1916
      %v1952 = vadd.f32 %v1824, %v1916
      %v1953 = vadd.f32 %v1825, %v1921
      %v1954 = vadd.f32 %v1826, %v1921
      %v1955 = vmax.f32 %v1923, 0.0
      %v1956 = vmax.f32 %v1924, 0.0
      %v1957 = vmax.f32 %v1925, 0.0
      %v1958 = vmax.f32 %v1926, 0.0
      %v1959 = vmax.f32 %v1927, 0.0
      %v1960 = vmax.f32 %v1928, 0.0
      %v1961 = vmax.f32 %v1929, 0.0
      %v1962 = vmax.f32 %v1930, 0.0
      %v1963 = vmax.f32 %v1931, 0.0
      %v1964 = vmax.f32 %v1932, 0.0
      %v1965 = vmax.f32 %v1933, 0.0
      %v1966 = vmax.f32 %v1934, 0.0
      %v1967 = vmax.f32 %v1935, 0.0
      %v1968 = vmax.f32 %v1936, 0.0
      %v1969 = vmax.f32 %v1937, 0.0
      %v1970 = vmax.f32 %v1938, 0.0
      %v1971 = vmax.f32 %v1939, 0.0
      %v1972 = vmax.f32 %v1940, 0.0
      %v1973 = vmax.f32 %v1941, 0.0
      %v1974 = vmax.f32 %v1942, 0.0
      %v1975 = vmax.f32 %v1943, 0.0
      %v1976 = vmax.f32 %v1944, 0.0
      %v1977 = vmax.f32 %v1945, 0.0
      %v1978 = vmax.f32 %v1946, 0.0
      %v1979 = vmax.f32 %v1947, 0.0
      %v1980 = vmax.f32 %v1948, 0.0
      %v1981 = vmax.f32 %v1949, 0.0
      %v1982 = vmax.f32 %v1950, 0.0
      %v1983 = vmax.f32 %v1951, 0.0
      %v1984 = vmax.f32 %v1952, 0.0
      %v1985 = vmax.f32 %v1953, 0.0
      %v1986 = vmax.f32 %v1954, 0.0
      %v1987 = vpack.c.bf16 %v1957, %v1955
      %v1988 = vpack.c.bf16 %v1958, %v1956
      %v1989 = vpack.c.bf16 %v1961, %v1959
      %v1990 = vpack.c.bf16 %v1962, %v1960
      %v1991 = vpack.c.bf16 %v1965, %v1963
      %v1992 = vpack.c.bf16 %v1966, %v1964
      %v1993 = vpack.c.bf16 %v1969, %v1967
      %v1994 = vpack.c.bf16 %v1970, %v1968
      %v1995 = vpack.c.bf16 %v1973, %v1971
      %v1996 = vpack.c.bf16 %v1974, %v1972
      %v1997 = vpack.c.bf16 %v1977, %v1975
      %v1998 = vpack.c.bf16 %v1978, %v1976
      %v1999 = vpack.c.bf16 %v1981, %v1979
      %v2000 = vpack.c.bf16 %v1982, %v1980
      %v2001 = vpack.c.bf16 %v1985, %v1983
      %v2002 = vpack.c.bf16 %v1986, %v1984
      %v2003 = vld [vmem:[%s11] sm:$0xf]
      %v2004 = vld [vmem:[%s11 + $0x4] sm:$0xf]
      %v2005 = vld [vmem:[%s11 + $0x8] sm:$0xf]
      %v2006 = vld [vmem:[%s11 + $0xc] sm:$0xf]
      %v2007 = vld [vmem:[%s11 + $0x10] sm:$0xf]
      %v2008 = vld [vmem:[%s11 + $0x14] sm:$0xf]
      %v2009 = vld [vmem:[%s11 + $0x18] sm:$0xf]
      %v2010 = vld [vmem:[%s11 + $0x1c] sm:$0xf]
      %v2011 = vld [vmem:[%s11 + $0x20] sm:$0xf]
      %v2012 = vld [vmem:[%s11 + $0x24] sm:$0xf]
      %v2013 = vld [vmem:[%s11 + $0x28] sm:$0xf]
      %v2014 = vld [vmem:[%s11 + $0x2c] sm:$0xf]
      %v2015 = vld [vmem:[%s11 + $0x30] sm:$0xf]
      %v2016 = vld [vmem:[%s11 + $0x34] sm:$0xf]
      %v2017 = vld [vmem:[%s11 + $0x38] sm:$0xf]
      %v2018 = vld [vmem:[%s11 + $0x3c] sm:$0xf]
      %v2019 = vld [vmem:[%s12] sm:$0xff]
      %v2020 = vld [vmem:[%s12 + $0x8] sm:$0xff]
      %v2021 = vld [vmem:[%s12 + $0x10] sm:$0xff]
      %v2022 = vld [vmem:[%s12 + $0x18] sm:$0xff]
      %v2023 = vld [vmem:[%s12 + $0x20] sm:$0xff]
      %v2024 = vld [vmem:[%s12 + $0x28] sm:$0xff]
      %v2025 = vld [vmem:[%s12 + $0x30] sm:$0xff]
      %v2026 = vld [vmem:[%s12 + $0x38] sm:$0xff]
      %v2027 = vld [vmem:[%s12 + $0x40] sm:$0xff]
      %v2028 = vld [vmem:[%s12 + $0x48] sm:$0xff]
      %v2029 = vld [vmem:[%s12 + $0x50] sm:$0xff]
      %v2030 = vld [vmem:[%s12 + $0x58] sm:$0xff]
      %v2031 = vld [vmem:[%s12 + $0x60] sm:$0xff]
      %v2032 = vld [vmem:[%s12 + $0x68] sm:$0xff]
      %v2033 = vld [vmem:[%s12 + $0x70] sm:$0xff]
      %v2034 = vld [vmem:[%s12 + $0x78] sm:$0xff]
      %2036 = vset.pattern.permute.xlu0 0
      %2037 = vperm.xlu0 %2036, %v2019
      %v2038 = vpop.permute.xlu0 %2037
      %2041 = vset.pattern.permute.xlu0 0
      %2042 = vperm.xlu0 %2041, %v2020
      %v2043 = vpop.permute.xlu0 %2042
      %2046 = vset.pattern.permute.xlu0 0
      %2047 = vperm.xlu0 %2046, %v2021
      %v2048 = vpop.permute.xlu0 %2047
      %2051 = vset.pattern.permute.xlu0 0
      %2052 = vperm.xlu0 %2051, %v2022
      %v2053 = vpop.permute.xlu0 %2052
      %2056 = vset.pattern.permute.xlu0 0
      %2057 = vperm.xlu0 %2056, %v2023
      %v2058 = vpop.permute.xlu0 %2057
      %2061 = vset.pattern.permute.xlu0 0
      %2062 = vperm.xlu0 %2061, %v2024
      %v2063 = vpop.permute.xlu0 %2062
      %2066 = vset.pattern.permute.xlu0 0
      %2067 = vperm.xlu0 %2066, %v2025
      %v2068 = vpop.permute.xlu0 %2067
      %2071 = vset.pattern.permute.xlu0 0
      %2072 = vperm.xlu0 %2071, %v2026
      %v2073 = vpop.permute.xlu0 %2072
      %2076 = vset.pattern.permute.xlu0 0
      %2077 = vperm.xlu0 %2076, %v2027
      %v2078 = vpop.permute.xlu0 %2077
      %2081 = vset.pattern.permute.xlu0 0
      %2082 = vperm.xlu0 %2081, %v2028
      %v2083 = vpop.permute.xlu0 %2082
      %2086 = vset.pattern.permute.xlu0 0
      %2087 = vperm.xlu0 %2086, %v2029
      %v2088 = vpop.permute.xlu0 %2087
      %2091 = vset.pattern.permute.xlu0 0
      %2092 = vperm.xlu0 %2091, %v2030
      %v2093 = vpop.permute.xlu0 %2092
      %2096 = vset.pattern.permute.xlu0 0
      %2097 = vperm.xlu0 %2096, %v2031
      %v2098 = vpop.permute.xlu0 %2097
      %2101 = vset.pattern.permute.xlu0 0
      %2102 = vperm.xlu0 %2101, %v2032
      %v2103 = vpop.permute.xlu0 %2102
      %2106 = vset.pattern.permute.xlu0 0
      %2107 = vperm.xlu0 %2106, %v2033
      %v2108 = vpop.permute.xlu0 %2107
      %2111 = vset.pattern.permute.xlu0 0
      %2112 = vperm.xlu0 %2111, %v2034
      %v2113 = vpop.permute.xlu0 %2112
      %v2131 = vunpack.c.l.b16 %v2003
      %v2132 = vunpack.c.l.b16 %v2004
      %v2133 = vunpack.c.l.b16 %v2005
      %v2134 = vunpack.c.l.b16 %v2006
      %v2135 = vunpack.c.l.b16 %v2007
      %v2136 = vunpack.c.l.b16 %v2008
      %v2137 = vunpack.c.l.b16 %v2009
      %v2138 = vunpack.c.l.b16 %v2010
      %v2139 = vunpack.c.l.b16 %v2011
      %v2140 = vunpack.c.l.b16 %v2012
      %v2141 = vunpack.c.l.b16 %v2013
      %v2142 = vunpack.c.l.b16 %v2014
      %v2143 = vunpack.c.l.b16 %v2015
      %v2144 = vunpack.c.l.b16 %v2016
      %v2145 = vunpack.c.l.b16 %v2017
      %v2146 = vunpack.c.l.b16 %v2018
      %v2147 = vpack.c.b16 %v2132, %v2131
      %v2148 = vpack.c.b16 %v2134, %v2133
      %v2149 = vpack.c.b16 %v2136, %v2135
      %v2150 = vpack.c.b16 %v2138, %v2137
      %v2151 = vpack.c.b16 %v2140, %v2139
      %v2152 = vpack.c.b16 %v2142, %v2141
      %v2153 = vpack.c.b16 %v2144, %v2143
      %v2154 = vpack.c.b16 %v2146, %v2145
      %2163 = vmatprep.subr.bf16.mxu0 %v1988
      %2164 = vmatpush1.bf16.msra.mxu0 %v1987
      %2165 = vmatprep.subr.bf16.mxu0 %v1990
      %2166 = vmatpush1.bf16.msra.mxu0 %v1989
      %2167 = vmatprep.subr.bf16.mxu0 %v1992
      %2168 = vmatpush1.bf16.msra.mxu0 %v1991
      %2169 = vmatprep.subr.bf16.mxu0 %v1994
      %2170 = vmatpush1.bf16.msra.mxu0 %v1993
      %2171 = vmatprep.subr.bf16.mxu0 %v1996
      %2172 = vmatpush1.bf16.msra.mxu0 %v1995
      %2173 = vmatprep.subr.bf16.mxu0 %v1998
      %2174 = vmatpush1.bf16.msra.mxu0 %v1997
      %2175 = vmatprep.subr.bf16.mxu0 %v2000
      %2176 = vmatpush1.bf16.msra.mxu0 %v1999
      %2177 = vmatprep.subr.bf16.mxu0 %v2002
      %2178 = vmatpush1.bf16.msra.mxu0 %v2001
      %2179 = vmatprep.subr.bf16.mxu0 0
      %2180 = vmatpush1.bf16.msra.mxu0 0
      %2181 = vmatprep.subr.bf16.mxu0 0
      %2182 = vmatpush1.bf16.msra.mxu0 0
      %2183 = vmatprep.subr.bf16.mxu0 0
      %2184 = vmatpush1.bf16.msra.mxu0 0
      %2185 = vmatprep.subr.bf16.mxu0 0
      %2186 = vmatpush1.bf16.msra.mxu0 0
      %2187 = vmatprep.subr.bf16.mxu0 0
      %2188 = vmatpush1.bf16.msra.mxu0 0
      %2189 = vmatprep.subr.bf16.mxu0 0
      %2190 = vmatpush1.bf16.msra.mxu0 0
      %2191 = vmatprep.subr.bf16.mxu0 0
      %2192 = vmatpush1.bf16.msra.mxu0 0
      %2193 = vmatprep.subr.bf16.mxu0 0
      %2194 = vmatpush1.bf16.msra.mxu0 0
      %2195 = vmatprep.mubr.bf16.mxu0 0
      %2196 = vmatmul.mubr.bf16.gmra.mrb[0].mxu0 %v2147
      %v2197 = vpop.f32.mrb[0].mxu0
      %v2198 = vadd.f32 %v2038, %v2197
      %v2199 = vpop.f32.mrb[0].mxu0
      %v2200 = vadd.f32 %v2038, %v2199
      %v2201 = vpop.f32.mrb[0].mxu0
      %v2202 = vadd.f32 %v2043, %v2201
      %v2203 = vpop.f32.mrb[0].mxu0
      %v2204 = vadd.f32 %v2043, %v2203
      %2205 = vmatprep.mubr.bf16.mxu0 0
      %2206 = vmatmul.mubr.bf16.gmra.mrb[0].mxu0 %v2148
      %v2207 = vpop.f32.mrb[0].mxu0
      %v2208 = vadd.f32 %v2048, %v2207
      %v2209 = vpop.f32.mrb[0].mxu0
      %v2210 = vadd.f32 %v2048, %v2209
      %v2211 = vpop.f32.mrb[0].mxu0
      %v2212 = vadd.f32 %v2053, %v2211
      %v2213 = vpop.f32.mrb[0].mxu0
      %v2214 = vadd.f32 %v2053, %v2213
      %2215 = vmatprep.mubr.bf16.mxu0 0
      %2216 = vmatmul.mubr.bf16.gmra.mrb[0].mxu0 %v2149
      %v2217 = vpop.f32.mrb[0].mxu0
      %v2218 = vadd.f32 %v2058, %v2217
      %v2219 = vpop.f32.mrb[0].mxu0
      %v2220 = vadd.f32 %v2058, %v2219
      %v2221 = vpop.f32.mrb[0].mxu0
      %v2222 = vadd.f32 %v2063, %v2221
      %v2223 = vpop.f32.mrb[0].mxu0
      %v2224 = vadd.f32 %v2063, %v2223
      %2225 = vmatprep.mubr.bf16.mxu0 0
      %2226 = vmatmul.mubr.bf16.gmra.mrb[0].mxu0 %v2150
      %v2227 = vpop.f32.mrb[0].mxu0
      %v2228 = vadd.f32 %v2068, %v2227
      %v2229 = vpop.f32.mrb[0].mxu0
      %v2230 = vadd.f32 %v2068, %v2229
      %v2231 = vpop.f32.mrb[0].mxu0
      %v2232 = vadd.f32 %v2073, %v2231
      %v2233 = vpop.f32.mrb[0].mxu0
      %v2234 = vadd.f32 %v2073, %v2233
      %2235 = vmatprep.mubr.bf16.mxu0 0
      %2236 = vmatmul.mubr.bf16.gmra.mrb[0].mxu0 %v2151
      %v2237 = vpop.f32.mrb[0].mxu0
      %v2238 = vadd.f32 %v2078, %v2237
      %v2239 = vpop.f32.mrb[0].mxu0
      %v2240 = vadd.f32 %v2078, %v2239
      %v2241 = vpop.f32.mrb[0].mxu0
      %v2242 = vadd.f32 %v2083, %v2241
      %v2243 = vpop.f32.mrb[0].mxu0
      %v2244 = vadd.f32 %v2083, %v2243
      %2245 = vmatprep.mubr.bf16.mxu0 0
      %2246 = vmatmul.mubr.bf16.gmra.mrb[0].mxu0 %v2152
      %v2247 = vpop.f32.mrb[0].mxu0
      %v2248 = vadd.f32 %v2088, %v2247
      %v2249 = vpop.f32.mrb[0].mxu0
      %v2250 = vadd.f32 %v2088, %v2249
      %v2251 = vpop.f32.mrb[0].mxu0
      %v2252 = vadd.f32 %v2093, %v2251
      %v2253 = vpop.f32.mrb[0].mxu0
      %v2254 = vadd.f32 %v2093, %v2253
      %2255 = vmatprep.mubr.bf16.mxu0 0
      %2256 = vmatmul.mubr.bf16.gmra.mrb[0].mxu0 %v2153
      %v2257 = vpop.f32.mrb[0].mxu0
      %v2258 = vadd.f32 %v2098, %v2257
      %v2259 = vpop.f32.mrb[0].mxu0
      %v2260 = vadd.f32 %v2098, %v2259
      %v2261 = vpop.f32.mrb[0].mxu0
      %v2262 = vadd.f32 %v2103, %v2261
      %v2263 = vpop.f32.mrb[0].mxu0
      %v2264 = vadd.f32 %v2103, %v2263
      %2265 = vmatprep.mubr.bf16.mxu0 0
      %2266 = vmatmul.mubr.bf16.gmra.mrb[0].mxu0 %v2154
      %v2267 = vpop.f32.mrb[0].mxu0
      %v2268 = vadd.f32 %v2108, %v2267
      %v2269 = vpop.f32.mrb[0].mxu0
      %v2270 = vadd.f32 %v2108, %v2269
      %v2271 = vpop.f32.mrb[0].mxu0
      %v2272 = vadd.f32 %v2113, %v2271
      %v2273 = vpop.f32.mrb[0].mxu0
      %v2274 = vadd.f32 %v2113, %v2273
      %2275 = vdwg.mxu0
      %v2276 = vmax.f32 %v2198, 0.0
      %v2277 = vmax.f32 %v2200, 0.0
      %v2278 = vmax.f32 %v2202, 0.0
      %v2279 = vmax.f32 %v2204, 0.0
      %v2280 = vmax.f32 %v2208, 0.0
      %v2281 = vmax.f32 %v2210, 0.0
      %v2282 = vmax.f32 %v2212, 0.0
      %v2283 = vmax.f32 %v2214, 0.0
      %v2284 = vmax.f32 %v2218, 0.0
      %v2285 = vmax.f32 %v2220, 0.0
      %v2286 = vmax.f32 %v2222, 0.0
      %v2287 = vmax.f32 %v2224, 0.0
      %v2288 = vmax.f32 %v2228, 0.0
      %v2289 = vmax.f32 %v2230, 0.0
      %v2290 = vmax.f32 %v2232, 0.0
      %v2291 = vmax.f32 %v2234, 0.0
      %v2292 = vmax.f32 %v2238, 0.0
      %v2293 = vmax.f32 %v2240, 0.0
      %v2294 = vmax.f32 %v2242, 0.0
      %v2295 = vmax.f32 %v2244, 0.0
      %v2296 = vmax.f32 %v2248, 0.0
      %v2297 = vmax.f32 %v2250, 0.0
      %v2298 = vmax.f32 %v2252, 0.0
      %v2299 = vmax.f32 %v2254, 0.0
      %v2300 = vmax.f32 %v2258, 0.0
      %v2301 = vmax.f32 %v2260, 0.0
      %v2302 = vmax.f32 %v2262, 0.0
      %v2303 = vmax.f32 %v2264, 0.0
      %v2304 = vmax.f32 %v2268, 0.0
      %v2305 = vmax.f32 %v2270, 0.0
      %v2306 = vmax.f32 %v2272, 0.0
      %v2307 = vmax.f32 %v2274, 0.0
      %v2308 = vpack.c.bf16 %v2278, %v2276
      %v2309 = vpack.c.bf16 %v2279, %v2277
      %v2310 = vpack.c.bf16 %v2282, %v2280
      %v2311 = vpack.c.bf16 %v2283, %v2281
      %v2312 = vpack.c.bf16 %v2286, %v2284
      %v2313 = vpack.c.bf16 %v2287, %v2285
      %v2314 = vpack.c.bf16 %v2290, %v2288
      %v2315 = vpack.c.bf16 %v2291, %v2289
      %v2316 = vpack.c.bf16 %v2294, %v2292
      %v2317 = vpack.c.bf16 %v2295, %v2293
      %v2318 = vpack.c.bf16 %v2298, %v2296
      %v2319 = vpack.c.bf16 %v2299, %v2297
      %v2320 = vpack.c.bf16 %v2302, %v2300
      %v2321 = vpack.c.bf16 %v2303, %v2301
      %v2322 = vpack.c.bf16 %v2306, %v2304
      %v2323 = vpack.c.bf16 %v2307, %v2305
      %v2324 = vld [vmem:[%s13] sm:$0xf]
      %v2325 = vld [vmem:[%s14] sm:$0xff]
      %2327 = vset.pattern.permute.xlu0 0
      %2328 = vperm.xlu0 %2327, %v2325
      %v2329 = vpop.permute.xlu0 %2328
      %2331 = vmatprep.subr.bf16.mxu0 %v2309
      %2332 = vmatpush1.bf16.msra.mxu0 %v2308
      %2333 = vmatprep.subr.bf16.mxu0 %v2311
      %2334 = vmatpush1.bf16.msra.mxu0 %v2310
      %2335 = vmatprep.subr.bf16.mxu0 %v2313
      %2336 = vmatpush1.bf16.msra.mxu0 %v2312
      %2337 = vmatprep.subr.bf16.mxu0 %v2315
      %2338 = vmatpush1.bf16.msra.mxu0 %v2314
      %2339 = vmatprep.subr.bf16.mxu0 %v2317
      %2340 = vmatpush1.bf16.msra.mxu0 %v2316
      %2341 = vmatprep.subr.bf16.mxu0 %v2319
      %2342 = vmatpush1.bf16.msra.mxu0 %v2318
      %2343 = vmatprep.subr.bf16.mxu0 %v2321
      %2344 = vmatpush1.bf16.msra.mxu0 %v2320
      %2345 = vmatprep.subr.bf16.mxu0 %v2323
      %2346 = vmatpush1.bf16.msra.mxu0 %v2322
      %2347 = vmatprep.subr.bf16.mxu0 0
      %2348 = vmatpush1.bf16.msra.mxu0 0
      %2349 = vmatprep.subr.bf16.mxu0 0
      %2350 = vmatpush1.bf16.msra.mxu0 0
      %2351 = vmatprep.subr.bf16.mxu0 0
      %2352 = vmatpush1.bf16.msra.mxu0 0
      %2353 = vmatprep.subr.bf16.mxu0 0
      %2354 = vmatpush1.bf16.msra.mxu0 0
      %2355 = vmatprep.subr.bf16.mxu0 0
      %2356 = vmatpush1.bf16.msra.mxu0 0
      %2357 = vmatprep.subr.bf16.mxu0 0
      %2358 = vmatpush1.bf16.msra.mxu0 0
      %2359 = vmatprep.subr.bf16.mxu0 0
      %2360 = vmatpush1.bf16.msra.mxu0 0
      %2361 = vmatprep.subr.bf16.mxu0 0
      %2362 = vmatpush1.bf16.msra.mxu0 0
      %2363 = vmatprep.mubr.bf16.mxu0 0
      %2364 = vmatmul.mubr.bf16.gmra.mrb[0].mxu0 %v2324
      %v2365 = vpop.f32.mrb[0].mxu0
      %v2366 = vadd.f32 %v2329, %v2365
      %v2367 = vpop.f32.mrb[0].mxu0
      %v2368 = vadd.f32 %v2329, %v2367
      %v2369 = vpop.f32.mrb[0].mxu0
      %v2370 = vpop.f32.mrb[0].mxu0
      %2371 = vdwg.mxu0
      %v2372 = vsub.f32 0.0, %v2366
      %v2373 = vsub.f32 0.0, %v2368
      %v2374 = vmul.f32 %v2372, 1.442695
      %v2375 = vpow.pop %v2374
      %v2376 = vmul.f32 %v2373, 1.442695
      %v2377 = vpow.pop %v2376
      %v2378 = vadd.f32 %v2375, 1.0
      %v2379 = vadd.f32 %v2377, 1.0
      %v2380 = vrcp.pop %v2378
      %v2381 = vrcp.pop %v2379
      %v2382 = vpack.c.bf16 %v2380, %v2380
      %v2383 = vpack.c.bf16 %v2381, %v2381
      %v2386 = vunpack.c.l.b16 %v2382
      %v2387 = vunpack.c.l.b16 %v2383
      %v2388 = vpack.c.b16 %v2387, %v2386
      %2390 = vst [vmem:[%s676] sm:$0xff] %v2388
      %s2391 = smul.u32 2, %s31
      %p2392 = scmp.lt.s32.totalorder %s30, 1
      %s2393 = scalar_select %p2392, %s30, 1
      %p2394 = scmp.lt.s32.totalorder %s2391, 1
      %s2395 = scalar_select %p2394, %s2391, 1
      %s2396 = smul.addr %s2393, 2
      %s2397 = sadd.s32 %s2395, %s2396
      %s2398 = smul.addr %s2397, 4
      %s2399 = scalar_lea.vmem %s15, %s2398
      // Predicated region
      $region81: #{implicit_shader_forward.1} parent=79 // pred_check
        %p2400 = pneg %p408
      $region82: #{implicit_shader_forward.1} parent=79 // pred_check_branch
        %2402 = sbr.rel (%p2400) target = $region84
      $region83: #{implicit_shader_forward.1} parent=79 // pred_region
        %s2403 = smul.u32 2, %s31
      $region84: #{implicit_shader_forward.1} parent=79 // pred_fallthru
        _
    $region80: #{implicit_shader_forward.1} parent=5 // pred_fallthru
      _
    %p2404 = scmp.le.s32.totalorder 2, %s21
    // Predicated region
    $region85: #{implicit_shader_forward.1} parent=5 // pred_check
      %p2405 = pneg %p2404
    $region86: #{implicit_shader_forward.1} parent=5 // pred_check_branch
      %2407 = sbr.rel (%p2405) target = $region88
    $region87: #{implicit_shader_forward.1} parent=5 // pred_region
      %s2408 = ssub.s32 %s21, 2
      // Predicated region
      $region89: #{implicit_shader_forward.1} parent=87 // pred_check
        %p2409 = pneg %p414
      $region90: #{implicit_shader_forward.1} parent=87 // pred_check_branch
        %2411 = sbr.rel (%p2409) target = $region92
      $region91: #{implicit_shader_forward.1} parent=87 // pred_region
        %s2412 = smul.u32 2, %s33
        %p2413 = scmp.lt.s32.totalorder %s32, 1
        %s2414 = scalar_select %p2413, %s32, 1
        %p2415 = scmp.lt.s32.totalorder %s2412, 1
        %s2416 = scalar_select %p2415, %s2412, 1
        %s2417 = smul.addr %s2414, 2
        %s2418 = sadd.s32 %s2416, %s2417
        %s2419 = smul.addr %s2418, 4
        %s2420 = scalar_lea.vmem %s15, %s2419
      $region92: #{implicit_shader_forward.1} parent=87 // pred_fallthru
        _
    $region88: #{implicit_shader_forward.1} parent=5 // pred_fallthru
      _
  $region6: #{implicit_shader_forward.1} parent=0 // loop_footer
    %s25 = sadd.s32 1, %s21
  $region7: #{implicit_shader_forward.1} parent=0 // loop_footer_branch
    %20 = sbr.rel target = $region3
  $region8: #{implicit_shader_forward.1} parent=0 // loop_exit
    _

</llo_original>
